<compile_context>
chip_gen: v6e
topology: v6e:2x2x1
jax: 0.10.0
libtpu: 0.0.40
codegen_flags: <defaults>
</compile_context>

<pallas_src>
import jax
import jax.numpy as jnp
from jax.experimental import pallas as pl
from jax.experimental.pallas import tpu as pltpu

LN_EPS = 1e-5


# --------------------------------------------------------------------------
# Parameter packing: many tiny arrays -> few contiguous slabs (one-time cost)
# --------------------------------------------------------------------------
def _pack_rows(arrays):
    """Stack same-lane-width 2-D arrays along rows with 8-aligned starts.

    Returns (slab, offsets) where offsets are static Python ints used for free
    in-kernel slicing.
    """
    offs, r = [], 0
    for a in arrays:
        offs.append(r)
        r += a.shape[0]
        r = ((r + 7) // 8) * 8          # keep every slice start sublane-aligned
    lane = arrays[0].shape[1]
    slab = jnp.zeros((r, lane), jnp.float32)
    for a, o in zip(arrays, offs):
        slab = slab.at[o:o + a.shape[0], :].set(a.astype(jnp.float32))
    return slab, tuple(offs)


def prepare_params(p, B, L, C, COUT):
    """Re-layout the raw parameters into 3 packed slabs (kernel layout)."""
    H = COUT // 4
    f32 = jnp.float32

    # Slab 1: stage-1/2 conv weights/biases + LN gamma/beta tiled for the row-stacked batch.
    ps, offs_s = _pack_rows([
        p['w1'].reshape(3 * C, C), p['b1'],
        jnp.tile(p['g1'], (B, 1)), jnp.tile(p['bt1'], (B, 1)),
        p['w2'].reshape(3 * C, C), p['b2'],
        jnp.tile(p['g2'], (B, 1)), jnp.tile(p['bt2'], (B, 1)),
    ])

    # Slab 2: conv-3 (im2col layout) weight + bias.
    p3, offs_3 = _pack_rows([p['w3'].reshape(3 * C, COUT), p['b3']])

    # Slab 3: fused [cls | reg] MLP heads.  Layer 1 concatenated, layers 2/3 block-diagonal
    # so the heads stay independent while sharing one matmul per layer.
    zHH = jnp.zeros((H, H), f32)
    zH1 = jnp.zeros((H, 1), f32)
    hw1 = jnp.concatenate([p['cw1'], p['rw1']], axis=1)                      # (COUT, 2H)
    hb1 = jnp.concatenate([p['cb1'], p['rb1']], axis=1)                      # (1, 2H)
    hw2 = jnp.concatenate([jnp.concatenate([p['cw2'], zHH], axis=1),
                           jnp.concatenate([zHH, p['rw2']], axis=1)], axis=0)  # (2H, 2H)
    hb2 = jnp.concatenate([p['cb2'], p['rb2']], axis=1)                      # (1, 2H)
    hw3 = jnp.concatenate([jnp.concatenate([p['cw3'], zH1], axis=1),
                           jnp.concatenate([zH1, p['rw3']], axis=1)], axis=0)  # (2H, 2)
    hb3 = jnp.concatenate([p['cb3'], p['rb3']], axis=1)                      # (1, 2)
    # Pad lanes to 2H so layer 3 packs into the same slab (cols >= 2 are zero / ignored).
    hw3 = jnp.pad(hw3, ((0, 0), (0, 2 * H - 2)))
    hb3 = jnp.pad(hb3, ((0, 0), (0, 2 * H - 2)))
    ph, offs_h = _pack_rows([hw1, hb1, hw2, hb2, hw3, hb3])

    return (ps, p3, ph), (offs_s, offs_3, offs_h)


# --------------------------------------------------------------------------
# The fused kernel (factory closes over static shapes + slab offsets)
# --------------------------------------------------------------------------
def _make_kernel(B, L, C, COUT, H, offs_s, offs_3, offs_h):
    # Power-of-two seq_len lets all index math use shifts/masks (no vector int div/rem).
    # TODO(synk): generalize to non-power-of-two seq_len with lax.rem-based masks.
    assert L % 4 == 0 and (L & (L - 1)) == 0, "this script assumes power-of-two seq_len"
    L1, L2, L4 = L, L // 2, L // 4
    R1, R2, R4 = B * L1, B * L2, B * L4
    TWO_H, K3 = 2 * H, 3 * C
    log2 = lambda n: n.bit_length() - 1

    def kernel(x_ref, ps_ref, p3_ref, ph_ref, cls_ref, reg_ref):
        f32 = jnp.float32

        def conv3(h, rows, seg_len, w, b):
            # Conv1d(k=3, stride=1, padding=1), channels-last, batch row-stacked.
            # Halos: XLU roll + iota edge mask (no sublane concat); one MXU im2col matmul.
            pos = jnp.bitwise_and(
                jax.lax.broadcasted_iota(jnp.int32, h.shape, 0), seg_len - 1)
            h_m1 = jnp.where(pos == 0, 0.0, pltpu.roll(h, 1, axis=0))              # h[l-1]
            h_p1 = jnp.where(pos == seg_len - 1, 0.0,
                             pltpu.roll(h, rows - 1, axis=0))                      # h[l+1]
            him = jnp.concatenate([h_m1, h, h_p1], axis=1)                         # (rows, 3C)
            return jnp.dot(him, w, preferred_element_type=f32) + b

        def layernorm(y, rows, seg_len, g, bt):
            # torch LayerNorm((C, L)): per-sample stats over the whole (L, C) slab.
            # One-pass stats; per-sample segment-sum + broadcast in one tiny matmul.
            rs = jnp.sum(y, axis=1, keepdims=True)                                 # (rows, 1)
            rq = jnp.sum(y * y, axis=1, keepdims=True)                             # (rows, 1)
            sh = log2(seg_len)
            ri = jnp.right_shift(jax.lax.broadcasted_iota(jnp.int32, (rows, rows), 0), sh)
            ci = jnp.right_shift(jax.lax.broadcasted_iota(jnp.int32, (rows, rows), 1), sh)
            seg = (ri == ci).astype(f32)                                           # block-diag 1s
            tot = jnp.dot(seg, jnp.concatenate([rs, rq], axis=1),
                          preferred_element_type=f32)                              # (rows, 2)
            inv_n = 1.0 / float(seg_len * C)
            mean = tot[:, 0:1] * inv_n
            var = tot[:, 1:2] * inv_n - mean * mean
            return (y - mean) * jax.lax.rsqrt(var + LN_EPS) * g + bt

        def maxpool2(y, rows):
            # MaxPool1d(2): adjacent-row max (XLU roll + VPU max) + one even-row one-hot
            # selector matmul (exact) to halve the row count.  LeakyReLU(1.0) == identity.
            m = jnp.maximum(y, pltpu.roll(y, rows - 1, axis=0))
            r = jax.lax.broadcasted_iota(jnp.int32, (rows // 2, rows), 0)
            c = jax.lax.broadcasted_iota(jnp.int32, (rows // 2, rows), 1)
            sel = (c == jnp.left_shift(r, 1)).astype(f32)
            return jnp.dot(sel, m, preferred_element_type=f32)

        # ---- unpack packed parameter slabs (static ref slices: free) ----
        oW1, oB1, oG1, oBT1, oW2, oB2, oG2, oBT2 = offs_s
        w1, b1 = ps_ref[oW1:oW1 + K3, :], ps_ref[oB1:oB1 + 1, :]
        g1, bt1 = ps_ref[oG1:oG1 + R1, :], ps_ref[oBT1:oBT1 + R1, :]
        w2, b2 = ps_ref[oW2:oW2 + K3, :], ps_ref[oB2:oB2 + 1, :]
        g2, bt2 = ps_ref[oG2:oG2 + R2, :], ps_ref[oBT2:oBT2 + R2, :]
        oW3, oB3 = offs_3
        w3, b3 = p3_ref[oW3:oW3 + K3, :], p3_ref[oB3:oB3 + 1, :]
        oHW1, oHB1, oHW2, oHB2, oHW3, oHB3 = offs_h
        hw1, hb1 = ph_ref[oHW1:oHW1 + COUT, :], ph_ref[oHB1:oHB1 + 1, :]
        hw2, hb2 = ph_ref[oHW2:oHW2 + TWO_H, :], ph_ref[oHB2:oHB2 + 1, :]
        hw3, hb3 = ph_ref[oHW3:oHW3 + TWO_H, :], ph_ref[oHB3:oHB3 + 1, :]

        # ---- conv trunk on the whole row-stacked batch (one matmul per stage) ----
        x = x_ref[...]                                                             # (B*L, C)
        h = maxpool2(layernorm(conv3(x, R1, L1, w1, b1), R1, L1, g1, bt1), R1)     # (B*L/2, C)
        h = maxpool2(layernorm(conv3(h, R2, L2, w2, b2), R2, L2, g2, bt2), R2)     # (B*L/4, C)
        y3 = conv3(h, R4, L4, w3, b3)                                              # (B*L/4, COUT)

        # ---- max over sequence per sample: torch.max(out, dim=1)[0] after permute back ----
        m = y3
        step = 1
        while step < L4:                       # log2(L/4) roll/max steps (L4 power of two)
            m = jnp.maximum(m, pltpu.roll(m, R4 - step, axis=0))
            step *= 2
        r = jax.lax.broadcasted_iota(jnp.int32, (B, R4), 0)
        c = jax.lax.broadcasted_iota(jnp.int32, (B, R4), 1)
        sel = (c == jnp.left_shift(r, log2(L4))).astype(f32)   # each sample's first row holds its max
        feat = jnp.dot(sel, m, preferred_element_type=f32)                         # (B, COUT)

        # ---- both MLP heads fused (Dropout p=0.6 eval & LeakyReLU(True)=slope 1.0 are identities) ----
        z = jnp.dot(feat, hw1, preferred_element_type=f32) + hb1
        z = jnp.dot(z, hw2, preferred_element_type=f32) + hb2
        logits = jnp.dot(z, hw3, preferred_element_type=f32) + hb3                 # (B, 2H); cols 0,1 valid
        cls_logit = logits[:, 0:1]
        cls_ref[...] = pl.reciprocal(1.0 + jnp.exp(-cls_logit), approx=True)       # sigmoid via EUP
        reg_ref[...] = logits[:, 1:2]

    return kernel


def make_cnn_forward(B, L, C, COUT, offsets):
    """Build the jitted forward: x (B, L, C) channels-last + 3 packed slabs -> (cls, reg)."""
    offs_s, offs_3, offs_h = offsets
    H = COUT // 4
    kernel = _make_kernel(B, L, C, COUT, H, offs_s, offs_3, offs_h)

    @jax.jit
    def forward(x, ps, p3, ph):
        x2 = x.reshape(B * L, C)                        # row-stack the batch (free in XLA)
        cls, reg = pl.pallas_call(
            kernel,
            out_shape=(jax.ShapeDtypeStruct((B, 1), jnp.float32),
                       jax.ShapeDtypeStruct((B, 1), jnp.float32)),
            in_specs=[pl.BlockSpec(memory_space=pltpu.MemorySpace.VMEM)
                      for _ in range(4)],
            out_specs=(pl.BlockSpec(memory_space=pltpu.MemorySpace.VMEM),
                       pl.BlockSpec(memory_space=pltpu.MemorySpace.VMEM)),
        )(x2, ps, p3, ph)
        return cls, reg

    return forward


# --------------------------------------------------------------------------
# Deterministic parameter init (shapes follow CNNModel.__init__)
# --------------------------------------------------------------------------
def init_params(key, C, L, COUT):
    H = COUT // 4
    ks = jax.random.split(key, 16)
    f32 = jnp.float32
    p = {}
    p['w1'] = 0.1 * jax.random.normal(ks[0], (3, C, C), f32)        # tap-major, channels-last
    p['b1'] = 0.05 * jax.random.normal(ks[1], (1, C), f32)
    p['g1'] = 1.0 + 0.05 * jax.random.normal(ks[2], (L, C), f32)    # LN((C,L)).weight, transposed
    p['bt1'] = 0.05 * jax.random.normal(ks[3], (L, C), f32)
    p['w2'] = 0.1 * jax.random.normal(ks[4], (3, C, C), f32)
    p['b2'] = 0.05 * jax.random.normal(ks[5], (1, C), f32)
    p['g2'] = 1.0 + 0.05 * jax.random.normal(ks[6], (L // 2, C), f32)
    p['bt2'] = 0.05 * jax.random.normal(ks[7], (L // 2, C), f32)
    p['w3'] = 0.1 * jax.random.normal(ks[8], (3, C, COUT), f32)
    p['b3'] = 0.05 * jax.random.normal(ks[9], (1, COUT), f32)
    # Linear layers: nn.init.normal_(w, 0, 0.01), bias = 0
    p['rw1'] = 0.01 * jax.random.normal(ks[10], (COUT, H), f32)
    p['rb1'] = jnp.zeros((1, H), f32)
    p['rw2'] = 0.01 * jax.random.normal(ks[11], (H, H), f32)
    p['rb2'] = jnp.zeros((1, H), f32)
    p['rw3'] = 0.01 * jax.random.normal(ks[12], (H, 1), f32)
    p['rb3'] = jnp.zeros((1, 1), f32)
    p['cw1'] = 0.01 * jax.random.normal(ks[13], (COUT, H), f32)
    p['cb1'] = jnp.zeros((1, H), f32)
    p['cw2'] = 0.01 * jax.random.normal(ks[14], (H, H), f32)
    p['cb2'] = jnp.zeros((1, H), f32)
    p['cw3'] = 0.01 * jax.random.normal(ks[15], (H, 1), f32)
    p['cb3'] = jnp.zeros((1, 1), f32)
    return p


# --------------------------------------------------------------------------
# Pure-JAX reference (verification only, uses the raw parameters)
# --------------------------------------------------------------------------
def reference_forward(x, p):
    def conv1d(h, w, b):
        L = h.shape[1]
        hp = jnp.pad(h, ((0, 0), (1, 1), (0, 0)))
        return (jnp.einsum('blc,cd->bld', hp[:, 0:L], w[0])
                + jnp.einsum('blc,cd->bld', hp[:, 1:L + 1], w[1])
                + jnp.einsum('blc,cd->bld', hp[:, 2:L + 2], w[2]) + b)

    def ln(h, g, bt):
        m = jnp.mean(h, axis=(1, 2), keepdims=True)
        v = jnp.mean((h - m) ** 2, axis=(1, 2), keepdims=True)
        return (h - m) / jnp.sqrt(v + LN_EPS) * g[None] + bt[None]

    def pool(h):
        B, L, C = h.shape
        return jnp.max(h.reshape(B, L // 2, 2, C), axis=2)

    h = pool(ln(conv1d(x, p['w1'], p['b1']), p['g1'], p['bt1']))
    h = pool(ln(conv1d(h, p['w2'], p['b2']), p['g2'], p['bt2']))
    h = conv1d(h, p['w3'], p['b3'])
    feat = jnp.max(h, axis=1)

    def mlp(f, w1, b1, w2, b2, w3, b3):
        z = f @ w1 + b1          # Dropout / LeakyReLU(1.0) are identities
        z = z @ w2 + b2
        return z @ w3 + b3

    reg = mlp(feat, p['rw1'], p['rb1'], p['rw2'], p['rb2'], p['rw3'], p['rb3'])
    cls = jax.nn.sigmoid(mlp(feat, p['cw1'], p['cb1'], p['cw2'], p['cb2'],
                             p['cw3'], p['cb3']))
    return cls, reg


if __name__ == "__main__":
    # Small shapes consistent with the module: batch=2, seq_len=16, in_dim=8, conv_out=128.
    B, L, C, COUT = 2, 16, 8, 128
    key = jax.random.PRNGKey(0)
    kx, kp = jax.random.split(key)
    x = jax.random.normal(kx, (B, L, C), jnp.float32)   # torch input layout (batch, seq, in_dim)
    params = init_params(kp, C, L, COUT)
    packed, offsets = prepare_params(params, B, L, C, COUT)   # one-time weight re-layout
    forward = make_cnn_forward(B, L, C, COUT, offsets)

    cls_out, reg_out = forward(x, *packed)
    jax.block_until_ready((cls_out, reg_out))

    cls_ref, reg_ref = reference_forward(x, params)
    assert cls_out.shape == (B, 1) and reg_out.shape == (B, 1)
    assert jnp.allclose(cls_out, cls_ref, atol=2e-3, rtol=2e-2), (cls_out, cls_ref)
    assert jnp.allclose(reg_out, reg_ref, atol=2e-3, rtol=2e-2), (reg_out, reg_ref)
    print("KERNEL_OK")
</pallas_src>

<mosaic_0001>
module attributes {stable_mosaic.version = 11 : i64} {
  func.func @kernel(%arg0: memref<32x8xf32, #tpu.memory_space<vmem>>, %arg1: memref<160x8xf32, #tpu.memory_space<vmem>>, %arg2: memref<32x128xf32, #tpu.memory_space<vmem>>, %arg3: memref<280x64xf32, #tpu.memory_space<vmem>>, %arg4: memref<2x1xf32, #tpu.memory_space<vmem>>, %arg5: memref<2x1xf32, #tpu.memory_space<vmem>>) attributes {dimension_semantics = [], scalar_prefetch = 0 : i64, scratch_operands = 0 : i64, tpu.core_type = #tpu.core_type<tc>} {
    %c0 = arith.constant 0 : index
    %c0_0 = arith.constant 0 : index
    %0 = vector.load %arg1[%c0, %c0_0] : memref<160x8xf32, #tpu.memory_space<vmem>>, vector<24x8xf32>
    %c24 = arith.constant 24 : index
    %c0_1 = arith.constant 0 : index
    %1 = vector.load %arg1[%c24, %c0_1] : memref<160x8xf32, #tpu.memory_space<vmem>>, vector<1x8xf32>
    %c32 = arith.constant 32 : index
    %c0_2 = arith.constant 0 : index
    %2 = vector.load %arg1[%c32, %c0_2] : memref<160x8xf32, #tpu.memory_space<vmem>>, vector<32x8xf32>
    %c64 = arith.constant 64 : index
    %c0_3 = arith.constant 0 : index
    %3 = vector.load %arg1[%c64, %c0_3] : memref<160x8xf32, #tpu.memory_space<vmem>>, vector<32x8xf32>
    %c96 = arith.constant 96 : index
    %c0_4 = arith.constant 0 : index
    %4 = vector.load %arg1[%c96, %c0_4] : memref<160x8xf32, #tpu.memory_space<vmem>>, vector<24x8xf32>
    %c120 = arith.constant 120 : index
    %c0_5 = arith.constant 0 : index
    %5 = vector.load %arg1[%c120, %c0_5] : memref<160x8xf32, #tpu.memory_space<vmem>>, vector<1x8xf32>
    %c128 = arith.constant 128 : index
    %c0_6 = arith.constant 0 : index
    %6 = vector.load %arg1[%c128, %c0_6] : memref<160x8xf32, #tpu.memory_space<vmem>>, vector<16x8xf32>
    %c144 = arith.constant 144 : index
    %c0_7 = arith.constant 0 : index
    %7 = vector.load %arg1[%c144, %c0_7] : memref<160x8xf32, #tpu.memory_space<vmem>>, vector<16x8xf32>
    %c0_8 = arith.constant 0 : index
    %c0_9 = arith.constant 0 : index
    %8 = vector.load %arg2[%c0_8, %c0_9] : memref<32x128xf32, #tpu.memory_space<vmem>>, vector<24x128xf32>
    %c24_10 = arith.constant 24 : index
    %c0_11 = arith.constant 0 : index
    %9 = vector.load %arg2[%c24_10, %c0_11] : memref<32x128xf32, #tpu.memory_space<vmem>>, vector<1x128xf32>
    %c0_12 = arith.constant 0 : index
    %c0_13 = arith.constant 0 : index
    %10 = vector.load %arg3[%c0_12, %c0_13] : memref<280x64xf32, #tpu.memory_space<vmem>>, vector<128x64xf32>
    %c128_14 = arith.constant 128 : index
    %c0_15 = arith.constant 0 : index
    %11 = vector.load %arg3[%c128_14, %c0_15] : memref<280x64xf32, #tpu.memory_space<vmem>>, vector<1x64xf32>
    %c136 = arith.constant 136 : index
    %c0_16 = arith.constant 0 : index
    %12 = vector.load %arg3[%c136, %c0_16] : memref<280x64xf32, #tpu.memory_space<vmem>>, vector<64x64xf32>
    %c200 = arith.constant 200 : index
    %c0_17 = arith.constant 0 : index
    %13 = vector.load %arg3[%c200, %c0_17] : memref<280x64xf32, #tpu.memory_space<vmem>>, vector<1x64xf32>
    %c208 = arith.constant 208 : index
    %c0_18 = arith.constant 0 : index
    %14 = vector.load %arg3[%c208, %c0_18] : memref<280x64xf32, #tpu.memory_space<vmem>>, vector<64x64xf32>
    %c272 = arith.constant 272 : index
    %c0_19 = arith.constant 0 : index
    %15 = vector.load %arg3[%c272, %c0_19] : memref<280x64xf32, #tpu.memory_space<vmem>>, vector<1x64xf32>
    %c0_20 = arith.constant 0 : index
    %c0_21 = arith.constant 0 : index
    %16 = vector.load %arg0[%c0_20, %c0_21] : memref<32x8xf32, #tpu.memory_space<vmem>>, vector<32x8xf32>
    %17 = tpu.iota {dimensions = array<i32: 0>} : vector<32x8xi32>
    %c15_i32 = arith.constant 15 : i32
    %18 = vector.broadcast %c15_i32 : i32 to vector<32x8xi32>
    %19 = arith.andi %17, %18 : vector<32x8xi32>
    %c0_i32 = arith.constant 0 : i32
    %20 = vector.broadcast %c0_i32 : i32 to vector<32x8xi32>
    %21 = arith.cmpi eq, %19, %20 : vector<32x8xi32>
    %c1_i32 = arith.constant 1 : i32
    %22 = tpu.dynamic_rotate %16 by %c1_i32 dim 0 : vector<32x8xf32>, i32 -> vector<32x8xf32>
    %cst = arith.constant 0.000000e+00 : f32
    %23 = vector.broadcast %cst : f32 to vector<32x8xf32>
    %24 = arith.select %21, %23, %22 : vector<32x8xi1>, vector<32x8xf32>
    %c15_i32_22 = arith.constant 15 : i32
    %25 = vector.broadcast %c15_i32_22 : i32 to vector<32x8xi32>
    %26 = arith.cmpi eq, %19, %25 : vector<32x8xi32>
    %c31_i32 = arith.constant 31 : i32
    %27 = tpu.dynamic_rotate %16 by %c31_i32 dim 0 : vector<32x8xf32>, i32 -> vector<32x8xf32>
    %cst_23 = arith.constant 0.000000e+00 : f32
    %28 = vector.broadcast %cst_23 : f32 to vector<32x8xf32>
    %29 = arith.select %26, %28, %27 : vector<32x8xi1>, vector<32x8xf32>
    %30 = tpu.concatenate %24, %16, %29 in 1 : vector<32x8xf32>, vector<32x8xf32>, vector<32x8xf32> -> vector<32x24xf32>
    %cst_24 = arith.constant dense<0.000000e+00> : vector<32x8xf32>
    %31 = tpu.matmul %30, %0, %cst_24 {dimension_numbers = #tpu.dot_dimension_numbers<[1], [0], [0], [1], [0, 0, 1, 1], [], []>} : vector<32x24xf32>, vector<24x8xf32>, vector<32x8xf32> -> vector<32x8xf32>
    %32 = vector.broadcast %1 : vector<1x8xf32> to vector<32x8xf32>
    %33 = arith.addf %31, %32 : vector<32x8xf32>
    %cst_25 = arith.constant dense<0.000000e+00> : vector<32xf32>
    %34 = vector.multi_reduction <add>, %33, %cst_25 [1] : vector<32x8xf32> to vector<32xf32>
    %35 = vector.shape_cast %34 : vector<32xf32> to vector<32x1xf32>
    %36 = arith.mulf %33, %33 : vector<32x8xf32>
    %cst_26 = arith.constant dense<0.000000e+00> : vector<32xf32>
    %37 = vector.multi_reduction <add>, %36, %cst_26 [1] : vector<32x8xf32> to vector<32xf32>
    %38 = vector.shape_cast %37 : vector<32xf32> to vector<32x1xf32>
    %39 = tpu.iota {dimensions = array<i32: 0>} : vector<32x32xi32>
    %c4_i32 = arith.constant 4 : i32
    %40 = vector.broadcast %c4_i32 : i32 to vector<32x32xi32>
    %41 = arith.shrsi %39, %40 : vector<32x32xi32>
    %42 = tpu.iota {dimensions = array<i32: 1>} : vector<32x32xi32>
    %c4_i32_27 = arith.constant 4 : i32
    %43 = vector.broadcast %c4_i32_27 : i32 to vector<32x32xi32>
    %44 = arith.shrsi %42, %43 : vector<32x32xi32>
    %45 = arith.cmpi eq, %41, %44 : vector<32x32xi32>
    %46 = arith.extui %45 : vector<32x32xi1> to vector<32x32xi32>
    %47 = arith.sitofp %46 : vector<32x32xi32> to vector<32x32xf32>
    %48 = tpu.concatenate %35, %38 in 1 : vector<32x1xf32>, vector<32x1xf32> -> vector<32x2xf32>
    %cst_28 = arith.constant dense<0.000000e+00> : vector<32x2xf32>
    %49 = tpu.matmul %47, %48, %cst_28 {dimension_numbers = #tpu.dot_dimension_numbers<[1], [0], [0], [1], [0, 0, 1, 1], [], []>} : vector<32x32xf32>, vector<32x2xf32>, vector<32x2xf32> -> vector<32x2xf32>
    %50 = vector.extract_strided_slice %49 {offsets = [0, 0], sizes = [32, 1], strides = [1, 1]} : vector<32x2xf32> to vector<32x1xf32>
    %cst_29 = arith.constant 7.812500e-03 : f32
    %51 = vector.broadcast %cst_29 : f32 to vector<32x1xf32>
    %52 = arith.mulf %50, %51 : vector<32x1xf32>
    %53 = vector.extract_strided_slice %49 {offsets = [0, 1], sizes = [32, 1], strides = [1, 1]} : vector<32x2xf32> to vector<32x1xf32>
    %cst_30 = arith.constant 7.812500e-03 : f32
    %54 = vector.broadcast %cst_30 : f32 to vector<32x1xf32>
    %55 = arith.mulf %53, %54 : vector<32x1xf32>
    %56 = arith.mulf %52, %52 : vector<32x1xf32>
    %57 = arith.subf %55, %56 : vector<32x1xf32>
    %58 = vector.broadcast %52 : vector<32x1xf32> to vector<32x8xf32>
    %59 = arith.subf %33, %58 : vector<32x8xf32>
    %cst_31 = arith.constant 9.99999974E-6 : f32
    %60 = vector.broadcast %cst_31 : f32 to vector<32x1xf32>
    %61 = arith.addf %57, %60 : vector<32x1xf32>
    %62 = math.rsqrt %61 : vector<32x1xf32>
    %63 = vector.broadcast %62 : vector<32x1xf32> to vector<32x8xf32>
    %64 = arith.mulf %59, %63 : vector<32x8xf32>
    %65 = arith.mulf %64, %2 : vector<32x8xf32>
    %66 = arith.addf %65, %3 : vector<32x8xf32>
    %c31_i32_32 = arith.constant 31 : i32
    %67 = tpu.dynamic_rotate %66 by %c31_i32_32 dim 0 : vector<32x8xf32>, i32 -> vector<32x8xf32>
    %68 = arith.maximumf %66, %67 : vector<32x8xf32>
    %69 = tpu.iota {dimensions = array<i32: 0>} : vector<16x32xi32>
    %70 = tpu.iota {dimensions = array<i32: 1>} : vector<16x32xi32>
    %c1_i32_33 = arith.constant 1 : i32
    %71 = vector.broadcast %c1_i32_33 : i32 to vector<16x32xi32>
    %72 = arith.shli %69, %71 : vector<16x32xi32>
    %73 = arith.cmpi eq, %70, %72 : vector<16x32xi32>
    %74 = arith.extui %73 : vector<16x32xi1> to vector<16x32xi32>
    %75 = arith.sitofp %74 : vector<16x32xi32> to vector<16x32xf32>
    %cst_34 = arith.constant dense<0.000000e+00> : vector<16x8xf32>
    %76 = tpu.matmul %75, %68, %cst_34 {dimension_numbers = #tpu.dot_dimension_numbers<[1], [0], [0], [1], [0, 0, 1, 1], [], []>} : vector<16x32xf32>, vector<32x8xf32>, vector<16x8xf32> -> vector<16x8xf32>
    %77 = tpu.iota {dimensions = array<i32: 0>} : vector<16x8xi32>
    %c7_i32 = arith.constant 7 : i32
    %78 = vector.broadcast %c7_i32 : i32 to vector<16x8xi32>
    %79 = arith.andi %77, %78 : vector<16x8xi32>
    %c0_i32_35 = arith.constant 0 : i32
    %80 = vector.broadcast %c0_i32_35 : i32 to vector<16x8xi32>
    %81 = arith.cmpi eq, %79, %80 : vector<16x8xi32>
    %c1_i32_36 = arith.constant 1 : i32
    %82 = tpu.dynamic_rotate %76 by %c1_i32_36 dim 0 : vector<16x8xf32>, i32 -> vector<16x8xf32>
    %cst_37 = arith.constant 0.000000e+00 : f32
    %83 = vector.broadcast %cst_37 : f32 to vector<16x8xf32>
    %84 = arith.select %81, %83, %82 : vector<16x8xi1>, vector<16x8xf32>
    %c7_i32_38 = arith.constant 7 : i32
    %85 = vector.broadcast %c7_i32_38 : i32 to vector<16x8xi32>
    %86 = arith.cmpi eq, %79, %85 : vector<16x8xi32>
    %c15_i32_39 = arith.constant 15 : i32
    %87 = tpu.dynamic_rotate %76 by %c15_i32_39 dim 0 : vector<16x8xf32>, i32 -> vector<16x8xf32>
    %cst_40 = arith.constant 0.000000e+00 : f32
    %88 = vector.broadcast %cst_40 : f32 to vector<16x8xf32>
    %89 = arith.select %86, %88, %87 : vector<16x8xi1>, vector<16x8xf32>
    %90 = tpu.concatenate %84, %76, %89 in 1 : vector<16x8xf32>, vector<16x8xf32>, vector<16x8xf32> -> vector<16x24xf32>
    %cst_41 = arith.constant dense<0.000000e+00> : vector<16x8xf32>
    %91 = tpu.matmul %90, %4, %cst_41 {dimension_numbers = #tpu.dot_dimension_numbers<[1], [0], [0], [1], [0, 0, 1, 1], [], []>} : vector<16x24xf32>, vector<24x8xf32>, vector<16x8xf32> -> vector<16x8xf32>
    %92 = vector.broadcast %5 : vector<1x8xf32> to vector<16x8xf32>
    %93 = arith.addf %91, %92 : vector<16x8xf32>
    %cst_42 = arith.constant dense<0.000000e+00> : vector<16xf32>
    %94 = vector.multi_reduction <add>, %93, %cst_42 [1] : vector<16x8xf32> to vector<16xf32>
    %95 = vector.shape_cast %94 : vector<16xf32> to vector<16x1xf32>
    %96 = arith.mulf %93, %93 : vector<16x8xf32>
    %cst_43 = arith.constant dense<0.000000e+00> : vector<16xf32>
    %97 = vector.multi_reduction <add>, %96, %cst_43 [1] : vector<16x8xf32> to vector<16xf32>
    %98 = vector.shape_cast %97 : vector<16xf32> to vector<16x1xf32>
    %99 = tpu.iota {dimensions = array<i32: 0>} : vector<16x16xi32>
    %c3_i32 = arith.constant 3 : i32
    %100 = vector.broadcast %c3_i32 : i32 to vector<16x16xi32>
    %101 = arith.shrsi %99, %100 : vector<16x16xi32>
    %102 = tpu.iota {dimensions = array<i32: 1>} : vector<16x16xi32>
    %c3_i32_44 = arith.constant 3 : i32
    %103 = vector.broadcast %c3_i32_44 : i32 to vector<16x16xi32>
    %104 = arith.shrsi %102, %103 : vector<16x16xi32>
    %105 = arith.cmpi eq, %101, %104 : vector<16x16xi32>
    %106 = arith.extui %105 : vector<16x16xi1> to vector<16x16xi32>
    %107 = arith.sitofp %106 : vector<16x16xi32> to vector<16x16xf32>
    %108 = tpu.concatenate %95, %98 in 1 : vector<16x1xf32>, vector<16x1xf32> -> vector<16x2xf32>
    %cst_45 = arith.constant dense<0.000000e+00> : vector<16x2xf32>
    %109 = tpu.matmul %107, %108, %cst_45 {dimension_numbers = #tpu.dot_dimension_numbers<[1], [0], [0], [1], [0, 0, 1, 1], [], []>} : vector<16x16xf32>, vector<16x2xf32>, vector<16x2xf32> -> vector<16x2xf32>
    %110 = vector.extract_strided_slice %109 {offsets = [0, 0], sizes = [16, 1], strides = [1, 1]} : vector<16x2xf32> to vector<16x1xf32>
    %cst_46 = arith.constant 1.562500e-02 : f32
    %111 = vector.broadcast %cst_46 : f32 to vector<16x1xf32>
    %112 = arith.mulf %110, %111 : vector<16x1xf32>
    %113 = vector.extract_strided_slice %109 {offsets = [0, 1], sizes = [16, 1], strides = [1, 1]} : vector<16x2xf32> to vector<16x1xf32>
    %cst_47 = arith.constant 1.562500e-02 : f32
    %114 = vector.broadcast %cst_47 : f32 to vector<16x1xf32>
    %115 = arith.mulf %113, %114 : vector<16x1xf32>
    %116 = arith.mulf %112, %112 : vector<16x1xf32>
    %117 = arith.subf %115, %116 : vector<16x1xf32>
    %118 = vector.broadcast %112 : vector<16x1xf32> to vector<16x8xf32>
    %119 = arith.subf %93, %118 : vector<16x8xf32>
    %cst_48 = arith.constant 9.99999974E-6 : f32
    %120 = vector.broadcast %cst_48 : f32 to vector<16x1xf32>
    %121 = arith.addf %117, %120 : vector<16x1xf32>
    %122 = math.rsqrt %121 : vector<16x1xf32>
    %123 = vector.broadcast %122 : vector<16x1xf32> to vector<16x8xf32>
    %124 = arith.mulf %119, %123 : vector<16x8xf32>
    %125 = arith.mulf %124, %6 : vector<16x8xf32>
    %126 = arith.addf %125, %7 : vector<16x8xf32>
    %c15_i32_49 = arith.constant 15 : i32
    %127 = tpu.dynamic_rotate %126 by %c15_i32_49 dim 0 : vector<16x8xf32>, i32 -> vector<16x8xf32>
    %128 = arith.maximumf %126, %127 : vector<16x8xf32>
    %129 = tpu.iota {dimensions = array<i32: 0>} : vector<8x16xi32>
    %130 = tpu.iota {dimensions = array<i32: 1>} : vector<8x16xi32>
    %c1_i32_50 = arith.constant 1 : i32
    %131 = vector.broadcast %c1_i32_50 : i32 to vector<8x16xi32>
    %132 = arith.shli %129, %131 : vector<8x16xi32>
    %133 = arith.cmpi eq, %130, %132 : vector<8x16xi32>
    %134 = arith.extui %133 : vector<8x16xi1> to vector<8x16xi32>
    %135 = arith.sitofp %134 : vector<8x16xi32> to vector<8x16xf32>
    %cst_51 = arith.constant dense<0.000000e+00> : vector<8x8xf32>
    %136 = tpu.matmul %135, %128, %cst_51 {dimension_numbers = #tpu.dot_dimension_numbers<[1], [0], [0], [1], [0, 0, 1, 1], [], []>} : vector<8x16xf32>, vector<16x8xf32>, vector<8x8xf32> -> vector<8x8xf32>
    %137 = tpu.iota {dimensions = array<i32: 0>} : vector<8x8xi32>
    %c3_i32_52 = arith.constant 3 : i32
    %138 = vector.broadcast %c3_i32_52 : i32 to vector<8x8xi32>
    %139 = arith.andi %137, %138 : vector<8x8xi32>
    %c0_i32_53 = arith.constant 0 : i32
    %140 = vector.broadcast %c0_i32_53 : i32 to vector<8x8xi32>
    %141 = arith.cmpi eq, %139, %140 : vector<8x8xi32>
    %c1_i32_54 = arith.constant 1 : i32
    %142 = tpu.dynamic_rotate %136 by %c1_i32_54 dim 0 : vector<8x8xf32>, i32 -> vector<8x8xf32>
    %cst_55 = arith.constant 0.000000e+00 : f32
    %143 = vector.broadcast %cst_55 : f32 to vector<8x8xf32>
    %144 = arith.select %141, %143, %142 : vector<8x8xi1>, vector<8x8xf32>
    %c3_i32_56 = arith.constant 3 : i32
    %145 = vector.broadcast %c3_i32_56 : i32 to vector<8x8xi32>
    %146 = arith.cmpi eq, %139, %145 : vector<8x8xi32>
    %c7_i32_57 = arith.constant 7 : i32
    %147 = tpu.dynamic_rotate %136 by %c7_i32_57 dim 0 : vector<8x8xf32>, i32 -> vector<8x8xf32>
    %cst_58 = arith.constant 0.000000e+00 : f32
    %148 = vector.broadcast %cst_58 : f32 to vector<8x8xf32>
    %149 = arith.select %146, %148, %147 : vector<8x8xi1>, vector<8x8xf32>
    %150 = tpu.concatenate %144, %136, %149 in 1 : vector<8x8xf32>, vector<8x8xf32>, vector<8x8xf32> -> vector<8x24xf32>
    %cst_59 = arith.constant dense<0.000000e+00> : vector<8x128xf32>
    %151 = tpu.matmul %150, %8, %cst_59 {dimension_numbers = #tpu.dot_dimension_numbers<[1], [0], [0], [1], [0, 0, 1, 1], [], []>} : vector<8x24xf32>, vector<24x128xf32>, vector<8x128xf32> -> vector<8x128xf32>
    %152 = vector.broadcast %9 : vector<1x128xf32> to vector<8x128xf32>
    %153 = arith.addf %151, %152 : vector<8x128xf32>
    %c7_i32_60 = arith.constant 7 : i32
    %154 = tpu.dynamic_rotate %153 by %c7_i32_60 dim 0 : vector<8x128xf32>, i32 -> vector<8x128xf32>
    %155 = arith.maximumf %153, %154 : vector<8x128xf32>
    %c6_i32 = arith.constant 6 : i32
    %156 = tpu.dynamic_rotate %155 by %c6_i32 dim 0 : vector<8x128xf32>, i32 -> vector<8x128xf32>
    %157 = arith.maximumf %155, %156 : vector<8x128xf32>
    %158 = tpu.iota {dimensions = array<i32: 0>} : vector<2x8xi32>
    %159 = tpu.iota {dimensions = array<i32: 1>} : vector<2x8xi32>
    %c2_i32 = arith.constant 2 : i32
    %160 = vector.broadcast %c2_i32 : i32 to vector<2x8xi32>
    %161 = arith.shli %158, %160 : vector<2x8xi32>
    %162 = arith.cmpi eq, %159, %161 : vector<2x8xi32>
    %163 = arith.extui %162 : vector<2x8xi1> to vector<2x8xi32>
    %164 = arith.sitofp %163 : vector<2x8xi32> to vector<2x8xf32>
    %cst_61 = arith.constant dense<0.000000e+00> : vector<2x128xf32>
    %165 = tpu.matmul %164, %157, %cst_61 {dimension_numbers = #tpu.dot_dimension_numbers<[1], [0], [0], [1], [0, 0, 1, 1], [], []>} : vector<2x8xf32>, vector<8x128xf32>, vector<2x128xf32> -> vector<2x128xf32>
    %cst_62 = arith.constant dense<0.000000e+00> : vector<2x64xf32>
    %166 = tpu.matmul %165, %10, %cst_62 {dimension_numbers = #tpu.dot_dimension_numbers<[1], [0], [0], [1], [0, 0, 1, 1], [], []>} : vector<2x128xf32>, vector<128x64xf32>, vector<2x64xf32> -> vector<2x64xf32>
    %167 = vector.broadcast %11 : vector<1x64xf32> to vector<2x64xf32>
    %168 = arith.addf %166, %167 : vector<2x64xf32>
    %cst_63 = arith.constant dense<0.000000e+00> : vector<2x64xf32>
    %169 = tpu.matmul %168, %12, %cst_63 {dimension_numbers = #tpu.dot_dimension_numbers<[1], [0], [0], [1], [0, 0, 1, 1], [], []>} : vector<2x64xf32>, vector<64x64xf32>, vector<2x64xf32> -> vector<2x64xf32>
    %170 = vector.broadcast %13 : vector<1x64xf32> to vector<2x64xf32>
    %171 = arith.addf %169, %170 : vector<2x64xf32>
    %cst_64 = arith.constant dense<0.000000e+00> : vector<2x64xf32>
    %172 = tpu.matmul %171, %14, %cst_64 {dimension_numbers = #tpu.dot_dimension_numbers<[1], [0], [0], [1], [0, 0, 1, 1], [], []>} : vector<2x64xf32>, vector<64x64xf32>, vector<2x64xf32> -> vector<2x64xf32>
    %173 = vector.broadcast %15 : vector<1x64xf32> to vector<2x64xf32>
    %174 = arith.addf %172, %173 : vector<2x64xf32>
    %175 = vector.extract_strided_slice %174 {offsets = [0, 0], sizes = [2, 1], strides = [1, 1]} : vector<2x64xf32> to vector<2x1xf32>
    %cst_65 = arith.constant 0.000000e+00 : f32
    %176 = vector.broadcast %cst_65 : f32 to vector<2x1xf32>
    %177 = arith.subf %176, %175 : vector<2x1xf32>
    %178 = math.exp %177 : vector<2x1xf32>
    %cst_66 = arith.constant 1.000000e+00 : f32
    %179 = vector.broadcast %cst_66 : f32 to vector<2x1xf32>
    %180 = arith.addf %179, %178 : vector<2x1xf32>
    %181 = tpu.reciprocal %180 {approx = true} : vector<2x1xf32> -> vector<2x1xf32>
    %c0_67 = arith.constant 0 : index
    %c0_68 = arith.constant 0 : index
    %182 = vector.load %arg4[%c0_67, %c0_68] : memref<2x1xf32, #tpu.memory_space<vmem>>, vector<2x1xf32>
    tpu.vector_store %arg4[%c0_67, %c0_68], %181 {strides = array<i32>} : memref<2x1xf32, #tpu.memory_space<vmem>>, vector<2x1xf32>,
    %183 = vector.extract_strided_slice %174 {offsets = [0, 1], sizes = [2, 1], strides = [1, 1]} : vector<2x64xf32> to vector<2x1xf32>
    %c0_69 = arith.constant 0 : index
    %c0_70 = arith.constant 0 : index
    %184 = vector.load %arg5[%c0_69, %c0_70] : memref<2x1xf32, #tpu.memory_space<vmem>>, vector<2x1xf32>
    tpu.vector_store %arg5[%c0_69, %c0_70], %183 {strides = array<i32>} : memref<2x1xf32, #tpu.memory_space<vmem>>, vector<2x1xf32>,
    return
  }
}

</mosaic_0001>

<llo_original>
// kernel: forward.1
$region0: #{forward.1}
  #allocation0 [shape = 'u32[]', space=smem, size = 0x4, offset = 0x4, fixed_abs, tag = 'smem constant byte address 0x4 - core index']
  #allocation1 [shape = 'u32[144,128]{1,0:T(1,128)}', space=vmem, size = 0x12000, scoped, tag = 'internal scratch']
  %s0 = inlined_call_operand.vmem [shape: f32[32,8], index: 0, kind: input, shape index: {}]
  %s1 = inlined_call_operand.vmem [shape: f32[160,8], index: 1, kind: input, shape index: {}]
  %s2 = inlined_call_operand.vmem [shape: f32[32,128], index: 2, kind: input, shape index: {}]
  %s3 = inlined_call_operand.vmem [shape: f32[280,64], index: 3, kind: input, shape index: {}]
  %s4 = inlined_call_operand.vmem [shape: f32[2,1], index: 4, kind: output, shape index: {0}]
  %s5 = inlined_call_operand.vmem [shape: f32[2,1], index: 5, kind: output, shape index: {1}]
  %6 = xla_tuple %s4, %s5
  %s7 = sld [smem:[#allocation0]]
  $region34: #{forward.1} parent=0
    _
  %s9 = ssub.s32 1, %s7
  %s10 = scalar_select 0, %s9, %s7
  // Predicated region
  $region2: #{forward.1} parent=0 // pred_check
    _
  $region3: #{forward.1} parent=0 // pred_check_branch
    %12 = sbr.rel (0) target = $region5
  $region4: #{forward.1} parent=0 // pred_region
    _
  $region5: #{forward.1} parent=0 // pred_fallthru
    _
  // Predicated region
  $region6: #{forward.1} parent=0 // pred_check
    _
  $region7: #{forward.1} parent=0 // pred_check_branch
    %14 = sbr.rel (0) target = $region9
  $region8: #{forward.1} parent=0 // pred_region
    _
  $region9: #{forward.1} parent=0 // pred_fallthru
    _
  // Predicated region
  $region10: #{forward.1} parent=0 // pred_check
    _
  $region11: #{forward.1} parent=0 // pred_check_branch
    %16 = sbr.rel (0) target = $region13
  $region12: #{forward.1} parent=0 // pred_region
    _
  $region13: #{forward.1} parent=0 // pred_fallthru
    _
  // Predicated region
  $region14: #{forward.1} parent=0 // pred_check
    _
  $region15: #{forward.1} parent=0 // pred_check_branch
    %18 = sbr.rel (0) target = $region17
  $region16: #{forward.1} parent=0 // pred_region
    _
  $region17: #{forward.1} parent=0 // pred_fallthru
    _
  %v19 = vld [vmem:[%s1] sm:$0xff]
  %v20 = vld [vmem:[%s1 + $0x8] sm:$0xff]
  %v21 = vld [vmem:[%s1 + $0x10] sm:$0xff]
  %v22 = vld [vmem:[%s1 + $0x18] sm:$0x1]
  %v23 = vld [vmem:[%s1 + $0x20] sm:$0xff]
  %v24 = vld [vmem:[%s1 + $0x28] sm:$0xff]
  %v25 = vld [vmem:[%s1 + $0x30] sm:$0xff]
  %v26 = vld [vmem:[%s1 + $0x38] sm:$0xff]
  %v27 = vld [vmem:[%s1 + $0x40] sm:$0xff]
  %v28 = vld [vmem:[%s1 + $0x48] sm:$0xff]
  %v29 = vld [vmem:[%s1 + $0x50] sm:$0xff]
  %v30 = vld [vmem:[%s1 + $0x58] sm:$0xff]
  %v31 = vld [vmem:[%s1 + $0x60] sm:$0xff]
  %v32 = vld [vmem:[%s1 + $0x68] sm:$0xff]
  %v33 = vld [vmem:[%s1 + $0x70] sm:$0xff]
  %v34 = vld [vmem:[%s1 + $0x78] sm:$0x1]
  %v35 = vld [vmem:[%s1 + $0x80] sm:$0xff]
  %v36 = vld [vmem:[%s1 + $0x88] sm:$0xff]
  %v37 = vld [vmem:[%s1 + $0x90] sm:$0xff]
  %v38 = vld [vmem:[%s1 + $0x98] sm:$0xff]
  %v39 = vld [vmem:[%s2] sm:$0xff]
  %v40 = vld [vmem:[%s2 + $0x8] sm:$0xff]
  %v41 = vld [vmem:[%s2 + $0x10] sm:$0xff]
  %v42 = vld [vmem:[%s2 + $0x18] sm:$0x1]
  %v43 = vld [vmem:[%s3] sm:$0xff]
  %v44 = vld [vmem:[%s3 + $0x8] sm:$0xff]
  %v45 = vld [vmem:[%s3 + $0x10] sm:$0xff]
  %v46 = vld [vmem:[%s3 + $0x18] sm:$0xff]
  %v47 = vld [vmem:[%s3 + $0x20] sm:$0xff]
  %v48 = vld [vmem:[%s3 + $0x28] sm:$0xff]
  %v49 = vld [vmem:[%s3 + $0x30] sm:$0xff]
  %v50 = vld [vmem:[%s3 + $0x38] sm:$0xff]
  %v51 = vld [vmem:[%s3 + $0x40] sm:$0xff]
  %v52 = vld [vmem:[%s3 + $0x48] sm:$0xff]
  %v53 = vld [vmem:[%s3 + $0x50] sm:$0xff]
  %v54 = vld [vmem:[%s3 + $0x58] sm:$0xff]
  %v55 = vld [vmem:[%s3 + $0x60] sm:$0xff]
  %v56 = vld [vmem:[%s3 + $0x68] sm:$0xff]
  %v57 = vld [vmem:[%s3 + $0x70] sm:$0xff]
  %v58 = vld [vmem:[%s3 + $0x78] sm:$0xff]
  %v59 = vld [vmem:[%s3 + $0x80] sm:$0x1]
  %v60 = vld [vmem:[%s3 + $0x88] sm:$0xff]
  %v61 = vld [vmem:[%s3 + $0x90] sm:$0xff]
  %v62 = vld [vmem:[%s3 + $0x98] sm:$0xff]
  %v63 = vld [vmem:[%s3 + $0xa0] sm:$0xff]
  %v64 = vld [vmem:[%s3 + $0xa8] sm:$0xff]
  %v65 = vld [vmem:[%s3 + $0xb0] sm:$0xff]
  %v66 = vld [vmem:[%s3 + $0xb8] sm:$0xff]
  %v67 = vld [vmem:[%s3 + $0xc0] sm:$0xff]
  %v68 = vld [vmem:[%s3 + $0xc8] sm:$0x1]
  %v69 = vld [vmem:[%s3 + $0xd0] sm:$0xff]
  %v70 = vld [vmem:[%s3 + $0xd8] sm:$0xff]
  %v71 = vld [vmem:[%s3 + $0xe0] sm:$0xff]
  %v72 = vld [vmem:[%s3 + $0xe8] sm:$0xff]
  %v73 = vld [vmem:[%s3 + $0xf0] sm:$0xff]
  %v74 = vld [vmem:[%s3 + $0xf8] sm:$0xff]
  %v75 = vld [vmem:[%s3 + $0x100] sm:$0xff]
  %v76 = vld [vmem:[%s3 + $0x108] sm:$0xff]
  %v77 = vld [vmem:[%s3 + $0x110] sm:$0x1]
  %v78 = vld [vmem:[%s0] sm:$0xff]
  %v79 = vld [vmem:[%s0 + $0x8] sm:$0xff]
  %v80 = vld [vmem:[%s0 + $0x10] sm:$0xff]
  %v81 = vld [vmem:[%s0 + $0x18] sm:$0xff]
  %v82 = vlaneseq
  %v83 = vshrl.u32 %v82, 7
  %v84 = vadd.s32 %v83, 8
  %v85 = vadd.s32 %v83, 16
  %v86 = vadd.s32 %v83, 24
  %v87 = vand.u32 %v83, 15
  %v88 = vand.u32 %v84, 15
  %v89 = vand.u32 %v85, 15
  %v90 = vand.u32 %v86, 15
  %vm91 = vcmp.eq.s32.totalorder %v87, 0
  %vm92 = vcmp.eq.s32.totalorder %v88, 0
  %vm93 = vcmp.eq.s32.totalorder %v89, 0
  %vm94 = vcmp.eq.s32.totalorder %v90, 0
  %v95 = vrot.slane %v78, 7
  %v96 = vrot.slane %v79, 7
  %v97 = vrot.slane %v80, 7
  %v98 = vrot.slane %v81, 7
  %vm99 = vcmp.lt.s32.totalorder %v83, 1
  %v100 = vsel %vm99, %v97, %v98
  %v101 = vsel %vm99, %v96, %v97
  %v102 = vsel %vm99, %v95, %v96
  %v103 = vsel %vm99, %v98, %v95
  %v104 = vsel %vm91, 0.0, %v103
  %v105 = vsel %vm92, 0.0, %v102
  %v106 = vsel %vm93, 0.0, %v101
  %v107 = vsel %vm94, 0.0, %v100
  %vm108 = vcmp.eq.s32.totalorder %v87, 15
  %vm109 = vcmp.eq.s32.totalorder %v88, 15
  %vm110 = vcmp.eq.s32.totalorder %v89, 15
  %vm111 = vcmp.eq.s32.totalorder %v90, 15
  %v112 = vrot.slane %v78, 1
  %v113 = vrot.slane %v79, 1
  %v114 = vrot.slane %v80, 1
  %v115 = vrot.slane %v81, 1
  %vm116 = vcmp.lt.s32.totalorder %v83, 7
  %v117 = vsel %vm116, %v114, %v115
  %v118 = vsel %vm116, %v113, %v114
  %v119 = vsel %vm116, %v112, %v113
  %v120 = vsel %vm116, %v115, %v112
  %v121 = vsel %vm108, 0.0, %v119
  %v122 = vsel %vm109, 0.0, %v118
  %v123 = vsel %vm110, 0.0, %v117
  %v124 = vsel %vm111, 0.0, %v120
  %129 = vrot.lane.b32.xlu0 %v78, 8
  %v130 = vpop.permute.xlu0 %129
  %131 = vrot.lane.b32.xlu0 %v79, 8
  %v132 = vpop.permute.xlu0 %131
  %133 = vrot.lane.b32.xlu0 %v80, 8
  %v134 = vpop.permute.xlu0 %133
  %135 = vrot.lane.b32.xlu0 %v81, 8
  %v136 = vpop.permute.xlu0 %135
  %145 = vrot.lane.b32.xlu0 %v121, 16
  %v146 = vpop.permute.xlu0 %145
  %147 = vrot.lane.b32.xlu0 %v122, 16
  %v148 = vpop.permute.xlu0 %147
  %149 = vrot.lane.b32.xlu0 %v123, 16
  %v150 = vpop.permute.xlu0 %149
  %151 = vrot.lane.b32.xlu0 %v124, 16
  %v152 = vpop.permute.xlu0 %151
  %vm157 = vcmask 64512
  %v158 = vsel %vm157, %v104, %v130
  %v159 = vsel %vm157, %v105, %v132
  %v160 = vsel %vm157, %v106, %v134
  %v161 = vsel %vm157, %v107, %v136
  %vm162 = vcmask 130048
  %v163 = vsel %vm162, %v158, %v146
  %v164 = vsel %vm162, %v159, %v148
  %v165 = vsel %vm162, %v160, %v150
  %v166 = vsel %vm162, %v161, %v152
  %v167 = vlaneseq
  %v168 = vshrl.u32 %v167, 7
  %v169 = vsub.s32 0, %v168
  %v170 = vrot.slane %v22, %v169
  %vm171 = vcmask 195584
  %v173 = vsel %vm171, %v163, 0
  %v176 = vsel %vm171, %v164, 0
  %v179 = vsel %vm171, %v165, 0
  %v182 = vsel %vm171, %v166, 0
  %184 = vmatprep.subr.mxu0 0.0
  %185 = vmatpush1.msra.mxu0 0.0
  %186 = vmatprep.subr.mxu0 0.0
  %187 = vmatpush1.msra.mxu0 0.0
  %188 = vmatprep.subr.mxu0 0.0
  %189 = vmatpush1.msra.mxu0 0.0
  %190 = vmatprep.subr.mxu0 0.0
  %191 = vmatpush1.msra.mxu0 0.0
  %192 = vmatprep.subr.mxu0 0.0
  %193 = vmatpush1.msra.mxu0 0.0
  %194 = vmatprep.subr.mxu0 0.0
  %195 = vmatpush1.msra.mxu0 0.0
  %196 = vmatprep.subr.mxu0 0.0
  %197 = vmatpush1.msra.mxu0 0.0
  %198 = vmatprep.subr.mxu0 0.0
  %199 = vmatpush1.msra.mxu0 0.0
  %200 = vmatprep.subr.mxu0 0.0
  %201 = vmatpush1.msra.mxu0 0.0
  %202 = vmatprep.subr.mxu0 0.0
  %203 = vmatpush1.msra.mxu0 0.0
  %204 = vmatprep.subr.mxu0 0.0
  %205 = vmatpush1.msra.mxu0 0.0
  %206 = vmatprep.subr.mxu0 0.0
  %207 = vmatpush1.msra.mxu0 0.0
  %208 = vmatprep.subr.mxu0 0.0
  %209 = vmatpush1.msra.mxu0 0.0
  %210 = vmatprep.subr.mxu0 0.0
  %211 = vmatpush1.msra.mxu0 %v21
  %212 = vmatprep.subr.mxu0 0.0
  %213 = vmatpush1.msra.mxu0 %v20
  %214 = vmatprep.subr.mxu0 0.0
  %215 = vmatpush1.msra.mxu0 %v19
  %216 = vmatprep.subr.mxu0 0.0
  %217 = vmatpush2.msra.mxu0 0.0
  %218 = vmatprep.subr.mxu0 0.0
  %219 = vmatpush2.msra.mxu0 0.0
  %220 = vmatprep.subr.mxu0 0.0
  %221 = vmatpush2.msra.mxu0 0.0
  %222 = vmatprep.subr.mxu0 0.0
  %223 = vmatpush2.msra.mxu0 0.0
  %224 = vmatprep.subr.mxu0 0.0
  %225 = vmatpush2.msra.mxu0 0.0
  %226 = vmatprep.subr.mxu0 0.0
  %227 = vmatpush2.msra.mxu0 0.0
  %228 = vmatprep.subr.mxu0 0.0
  %229 = vmatpush2.msra.mxu0 0.0
  %230 = vmatprep.subr.mxu0 0.0
  %231 = vmatpush2.msra.mxu0 0.0
  %232 = vmatprep.subr.mxu0 0.0
  %233 = vmatpush2.msra.mxu0 0.0
  %234 = vmatprep.subr.mxu0 0.0
  %235 = vmatpush2.msra.mxu0 0.0
  %236 = vmatprep.subr.mxu0 0.0
  %237 = vmatpush2.msra.mxu0 0.0
  %238 = vmatprep.subr.mxu0 0.0
  %239 = vmatpush2.msra.mxu0 0.0
  %240 = vmatprep.subr.mxu0 0.0
  %241 = vmatpush2.msra.mxu0 0.0
  %242 = vmatprep.subr.mxu0 0.0
  %243 = vmatpush2.msra.mxu0 0.0
  %244 = vmatprep.subr.mxu0 0.0
  %245 = vmatpush2.msra.mxu0 0.0
  %246 = vmatprep.subr.mxu0 0.0
  %247 = vmatpush2.msra.mxu0 0.0
  %248 = vmatprep.mubr.f32.mxu0 0.0
  %249 = vmatmul.mubr.f32.gmra.mxu0 %v173
  %v250 = vpop.f32.mrf.mxu0
  %v251 = vadd.f32 %v170, %v250
  %v252 = vpop.f32.mrf.mxu0
  %253 = vmatprep.mubr.f32.mxu0 0.0
  %254 = vmatmul.mubr.f32.gmra.mxu0 %v176
  %v255 = vpop.f32.mrf.mxu0
  %v256 = vadd.f32 %v170, %v255
  %v257 = vpop.f32.mrf.mxu0
  %258 = vmatprep.mubr.f32.mxu0 0.0
  %259 = vmatmul.mubr.f32.gmra.mxu0 %v179
  %v260 = vpop.f32.mrf.mxu0
  %v261 = vadd.f32 %v170, %v260
  %v262 = vpop.f32.mrf.mxu0
  %263 = vmatprep.mubr.f32.mxu0 0.0
  %264 = vmatmul.mubr.f32.gmra.mxu0 %v182
  %v265 = vpop.f32.mrf.mxu0
  %v266 = vadd.f32 %v170, %v265
  %v267 = vpop.f32.mrf.mxu0
  %268 = vdwg.mxu0
  %v269 = vsel %vm157, %v251, 0.0
  %270 = vadd.xlane.f32.xlu0 %v269
  %v271 = vpop.xlane.xlu0 %270
  %v272 = vsel %vm157, %v256, 0.0
  %273 = vadd.xlane.f32.xlu0 %v272
  %v274 = vpop.xlane.xlu0 %273
  %v275 = vsel %vm157, %v261, 0.0
  %276 = vadd.xlane.f32.xlu0 %v275
  %v277 = vpop.xlane.xlu0 %276
  %v278 = vsel %vm157, %v266, 0.0
  %279 = vadd.xlane.f32.xlu0 %v278
  %v280 = vpop.xlane.xlu0 %279
  %v281 = vmul.f32 %v251, %v251
  %v282 = vmul.f32 %v256, %v256
  %v283 = vmul.f32 %v261, %v261
  %v284 = vmul.f32 %v266, %v266
  %v285 = vsel %vm157, %v281, 0.0
  %286 = vadd.xlane.f32.xlu0 %v285
  %v287 = vpop.xlane.xlu0 %286
  %v288 = vsel %vm157, %v282, 0.0
  %289 = vadd.xlane.f32.xlu0 %v288
  %v290 = vpop.xlane.xlu0 %289
  %v291 = vsel %vm157, %v283, 0.0
  %292 = vadd.xlane.f32.xlu0 %v291
  %v293 = vpop.xlane.xlu0 %292
  %v294 = vsel %vm157, %v284, 0.0
  %295 = vadd.xlane.f32.xlu0 %v294
  %v296 = vpop.xlane.xlu0 %295
  %v297 = vshra.s32 %v83, 4
  %v298 = vshra.s32 %v84, 4
  %v299 = vshra.s32 %v85, 4
  %v300 = vshra.s32 %v86, 4
  %v301 = vlaneseq
  %v302 = vand.u32 %v301, 127
  %v303 = vshra.s32 %v302, 4
  %vm304 = vcmp.eq.s32.totalorder %v297, %v303
  %vm305 = vcmp.eq.s32.totalorder %v298, %v303
  %vm306 = vcmp.eq.s32.totalorder %v299, %v303
  %vm307 = vcmp.eq.s32.totalorder %v300, %v303
  %v308 = vsel %vm304, 1, 0
  %v309 = vsel %vm305, 1, 0
  %v310 = vsel %vm306, 1, 0
  %v311 = vsel %vm307, 1, 0
  %v312 = vcvt.s32.f32 %v308
  %v313 = vcvt.s32.f32 %v309
  %v314 = vcvt.s32.f32 %v310
  %v315 = vcvt.s32.f32 %v311
  %vm316 = vcmask 7168
  %v317 = vsel %vm316, %v271, %v287
  %v318 = vsel %vm316, %v274, %v290
  %v319 = vsel %vm316, %v277, %v293
  %v320 = vsel %vm316, %v280, %v296
  %vm321 = vcmask 261120
  %v323 = vsel %vm321, %v312, 0
  %v326 = vsel %vm321, %v313, 0
  %v329 = vsel %vm321, %v314, 0
  %v332 = vsel %vm321, %v315, 0
  %334 = vmatprep.subr.mxu0 0.0
  %335 = vmatpush1.msra.mxu0 0.0
  %336 = vmatprep.subr.mxu0 0.0
  %337 = vmatpush1.msra.mxu0 0.0
  %338 = vmatprep.subr.mxu0 0.0
  %339 = vmatpush1.msra.mxu0 0.0
  %340 = vmatprep.subr.mxu0 0.0
  %341 = vmatpush1.msra.mxu0 0.0
  %342 = vmatprep.subr.mxu0 0.0
  %343 = vmatpush1.msra.mxu0 0.0
  %344 = vmatprep.subr.mxu0 0.0
  %345 = vmatpush1.msra.mxu0 0.0
  %346 = vmatprep.subr.mxu0 0.0
  %347 = vmatpush1.msra.mxu0 0.0
  %348 = vmatprep.subr.mxu0 0.0
  %349 = vmatpush1.msra.mxu0 0.0
  %350 = vmatprep.subr.mxu0 0.0
  %351 = vmatpush1.msra.mxu0 0.0
  %352 = vmatprep.subr.mxu0 0.0
  %353 = vmatpush1.msra.mxu0 0.0
  %354 = vmatprep.subr.mxu0 0.0
  %355 = vmatpush1.msra.mxu0 0.0
  %356 = vmatprep.subr.mxu0 0.0
  %357 = vmatpush1.msra.mxu0 0.0
  %358 = vmatprep.subr.mxu0 0.0
  %359 = vmatpush1.msra.mxu0 %v320
  %360 = vmatprep.subr.mxu0 0.0
  %361 = vmatpush1.msra.mxu0 %v319
  %362 = vmatprep.subr.mxu0 0.0
  %363 = vmatpush1.msra.mxu0 %v318
  %364 = vmatprep.subr.mxu0 0.0
  %365 = vmatpush1.msra.mxu0 %v317
  %366 = vmatprep.subr.mxu0 0.0
  %367 = vmatpush2.msra.mxu0 0.0
  %368 = vmatprep.subr.mxu0 0.0
  %369 = vmatpush2.msra.mxu0 0.0
  %370 = vmatprep.subr.mxu0 0.0
  %371 = vmatpush2.msra.mxu0 0.0
  %372 = vmatprep.subr.mxu0 0.0
  %373 = vmatpush2.msra.mxu0 0.0
  %374 = vmatprep.subr.mxu0 0.0
  %375 = vmatpush2.msra.mxu0 0.0
  %376 = vmatprep.subr.mxu0 0.0
  %377 = vmatpush2.msra.mxu0 0.0
  %378 = vmatprep.subr.mxu0 0.0
  %379 = vmatpush2.msra.mxu0 0.0
  %380 = vmatprep.subr.mxu0 0.0
  %381 = vmatpush2.msra.mxu0 0.0
  %382 = vmatprep.subr.mxu0 0.0
  %383 = vmatpush2.msra.mxu0 0.0
  %384 = vmatprep.subr.mxu0 0.0
  %385 = vmatpush2.msra.mxu0 0.0
  %386 = vmatprep.subr.mxu0 0.0
  %387 = vmatpush2.msra.mxu0 0.0
  %388 = vmatprep.subr.mxu0 0.0
  %389 = vmatpush2.msra.mxu0 0.0
  %390 = vmatprep.subr.mxu0 0.0
  %391 = vmatpush2.msra.mxu0 0.0
  %392 = vmatprep.subr.mxu0 0.0
  %393 = vmatpush2.msra.mxu0 0.0
  %394 = vmatprep.subr.mxu0 0.0
  %395 = vmatpush2.msra.mxu0 0.0
  %396 = vmatprep.subr.mxu0 0.0
  %397 = vmatpush2.msra.mxu0 0.0
  %398 = vmatprep.mubr.f32.mxu0 0.0
  %399 = vmatmul.mubr.f32.gmra.mxu0 %v323
  %v400 = vpop.f32.mrf.mxu0
  %v401 = vadd.f32 0.0, %v400
  %v402 = vpop.f32.mrf.mxu0
  %403 = vmatprep.mubr.f32.mxu0 0.0
  %404 = vmatmul.mubr.f32.gmra.mxu0 %v326
  %v405 = vpop.f32.mrf.mxu0
  %v406 = vadd.f32 0.0, %v405
  %v407 = vpop.f32.mrf.mxu0
  %408 = vmatprep.mubr.f32.mxu0 0.0
  %409 = vmatmul.mubr.f32.gmra.mxu0 %v329
  %v410 = vpop.f32.mrf.mxu0
  %v411 = vadd.f32 0.0, %v410
  %v412 = vpop.f32.mrf.mxu0
  %413 = vmatprep.mubr.f32.mxu0 0.0
  %414 = vmatmul.mubr.f32.gmra.mxu0 %v332
  %v415 = vpop.f32.mrf.mxu0
  %v416 = vadd.f32 0.0, %v415
  %v417 = vpop.f32.mrf.mxu0
  %418 = vdwg.mxu0
  %v419 = vmul.f32 %v401, 0.0078125
  %v420 = vmul.f32 %v406, 0.0078125
  %v421 = vmul.f32 %v411, 0.0078125
  %v422 = vmul.f32 %v416, 0.0078125
  %v423 = vmul.f32 %v419, %v419
  %v424 = vmul.f32 %v420, %v420
  %v425 = vmul.f32 %v421, %v421
  %v426 = vmul.f32 %v422, %v422
  %431 = vrot.lane.b32.xlu0 %v423, 1
  %v432 = vpop.permute.xlu0 %431
  %433 = vrot.lane.b32.xlu0 %v424, 1
  %v434 = vpop.permute.xlu0 %433
  %435 = vrot.lane.b32.xlu0 %v425, 1
  %v436 = vpop.permute.xlu0 %435
  %437 = vrot.lane.b32.xlu0 %v426, 1
  %v438 = vpop.permute.xlu0 %437
  %v443 = vsub.f32 %v419, %v432
  %v444 = vsub.f32 %v420, %v434
  %v445 = vsub.f32 %v421, %v436
  %v446 = vsub.f32 %v422, %v438
  %448 = vset.pattern.permute.xlu0 0
  %449 = vperm.xlu0 %448, %v419
  %v450 = vpop.permute.xlu0 %449
  %453 = vset.pattern.permute.xlu0 0
  %454 = vperm.xlu0 %453, %v420
  %v455 = vpop.permute.xlu0 %454
  %458 = vset.pattern.permute.xlu0 0
  %459 = vperm.xlu0 %458, %v421
  %v460 = vpop.permute.xlu0 %459
  %463 = vset.pattern.permute.xlu0 0
  %464 = vperm.xlu0 %463, %v422
  %v465 = vpop.permute.xlu0 %464
  %v467 = vsub.f32 %v251, %v450
  %v468 = vsub.f32 %v256, %v455
  %v469 = vsub.f32 %v261, %v460
  %v470 = vsub.f32 %v266, %v465
  %v471 = vadd.f32 %v443, 1e-05
  %v472 = vadd.f32 %v444, 1e-05
  %v473 = vadd.f32 %v445, 1e-05
  %v474 = vadd.f32 %v446, 1e-05
  %v475 = vrsqrt.pop %v471
  %v476 = vrsqrt.pop %v472
  %v477 = vrsqrt.pop %v473
  %v478 = vrsqrt.pop %v474
  %480 = vset.pattern.permute.xlu0 1
  %481 = vperm.xlu0 %480, %v475
  %v482 = vpop.permute.xlu0 %481
  %485 = vset.pattern.permute.xlu0 1
  %486 = vperm.xlu0 %485, %v476
  %v487 = vpop.permute.xlu0 %486
  %490 = vset.pattern.permute.xlu0 1
  %491 = vperm.xlu0 %490, %v477
  %v492 = vpop.permute.xlu0 %491
  %495 = vset.pattern.permute.xlu0 1
  %496 = vperm.xlu0 %495, %v478
  %v497 = vpop.permute.xlu0 %496
  %v499 = vmul.f32 %v467, %v482
  %v500 = vmul.f32 %v468, %v487
  %v501 = vmul.f32 %v469, %v492
  %v502 = vmul.f32 %v470, %v497
  %v503 = vmul.f32 %v499, %v23
  %v504 = vmul.f32 %v500, %v24
  %v505 = vmul.f32 %v501, %v25
  %v506 = vmul.f32 %v502, %v26
  %v507 = vadd.f32 %v503, %v27
  %v508 = vadd.f32 %v504, %v28
  %v509 = vadd.f32 %v505, %v29
  %v510 = vadd.f32 %v506, %v30
  %v511 = vrot.slane %v507, 1
  %v512 = vrot.slane %v508, 1
  %v513 = vrot.slane %v509, 1
  %v514 = vrot.slane %v510, 1
  %v515 = vsel %vm116, %v513, %v514
  %v516 = vsel %vm116, %v512, %v513
  %v517 = vsel %vm116, %v511, %v512
  %v518 = vsel %vm116, %v514, %v511
  %v519 = vmax.f32 %v507, %v517
  %v520 = vmax.f32 %v508, %v516
  %v521 = vmax.f32 %v509, %v515
  %v522 = vmax.f32 %v510, %v518
  %v523 = vshll.u32 %v83, 1
  %v524 = vshll.u32 %v84, 1
  %vm525 = vcmp.eq.s32.totalorder %v302, %v523
  %vm526 = vcmp.eq.s32.totalorder %v302, %v524
  %v527 = vsel %vm525, 1, 0
  %v528 = vsel %vm526, 1, 0
  %v529 = vcvt.s32.f32 %v527
  %v530 = vcvt.s32.f32 %v528
  %v532 = vsel %vm321, %v529, 0
  %v535 = vsel %vm321, %v530, 0
  %537 = vmatprep.subr.mxu0 0.0
  %538 = vmatpush1.msra.mxu0 0.0
  %539 = vmatprep.subr.mxu0 0.0
  %540 = vmatpush1.msra.mxu0 0.0
  %541 = vmatprep.subr.mxu0 0.0
  %542 = vmatpush1.msra.mxu0 0.0
  %543 = vmatprep.subr.mxu0 0.0
  %544 = vmatpush1.msra.mxu0 0.0
  %545 = vmatprep.subr.mxu0 0.0
  %546 = vmatpush1.msra.mxu0 0.0
  %547 = vmatprep.subr.mxu0 0.0
  %548 = vmatpush1.msra.mxu0 0.0
  %549 = vmatprep.subr.mxu0 0.0
  %550 = vmatpush1.msra.mxu0 0.0
  %551 = vmatprep.subr.mxu0 0.0
  %552 = vmatpush1.msra.mxu0 0.0
  %553 = vmatprep.subr.mxu0 0.0
  %554 = vmatpush1.msra.mxu0 0.0
  %555 = vmatprep.subr.mxu0 0.0
  %556 = vmatpush1.msra.mxu0 0.0
  %557 = vmatprep.subr.mxu0 0.0
  %558 = vmatpush1.msra.mxu0 0.0
  %559 = vmatprep.subr.mxu0 0.0
  %560 = vmatpush1.msra.mxu0 0.0
  %561 = vmatprep.subr.mxu0 0.0
  %562 = vmatpush1.msra.mxu0 %v522
  %563 = vmatprep.subr.mxu0 0.0
  %564 = vmatpush1.msra.mxu0 %v521
  %565 = vmatprep.subr.mxu0 0.0
  %566 = vmatpush1.msra.mxu0 %v520
  %567 = vmatprep.subr.mxu0 0.0
  %568 = vmatpush1.msra.mxu0 %v519
  %569 = vmatprep.subr.mxu0 0.0
  %570 = vmatpush2.msra.mxu0 0.0
  %571 = vmatprep.subr.mxu0 0.0
  %572 = vmatpush2.msra.mxu0 0.0
  %573 = vmatprep.subr.mxu0 0.0
  %574 = vmatpush2.msra.mxu0 0.0
  %575 = vmatprep.subr.mxu0 0.0
  %576 = vmatpush2.msra.mxu0 0.0
  %577 = vmatprep.subr.mxu0 0.0
  %578 = vmatpush2.msra.mxu0 0.0
  %579 = vmatprep.subr.mxu0 0.0
  %580 = vmatpush2.msra.mxu0 0.0
  %581 = vmatprep.subr.mxu0 0.0
  %582 = vmatpush2.msra.mxu0 0.0
  %583 = vmatprep.subr.mxu0 0.0
  %584 = vmatpush2.msra.mxu0 0.0
  %585 = vmatprep.subr.mxu0 0.0
  %586 = vmatpush2.msra.mxu0 0.0
  %587 = vmatprep.subr.mxu0 0.0
  %588 = vmatpush2.msra.mxu0 0.0
  %589 = vmatprep.subr.mxu0 0.0
  %590 = vmatpush2.msra.mxu0 0.0
  %591 = vmatprep.subr.mxu0 0.0
  %592 = vmatpush2.msra.mxu0 0.0
  %593 = vmatprep.subr.mxu0 0.0
  %594 = vmatpush2.msra.mxu0 0.0
  %595 = vmatprep.subr.mxu0 0.0
  %596 = vmatpush2.msra.mxu0 0.0
  %597 = vmatprep.subr.mxu0 0.0
  %598 = vmatpush2.msra.mxu0 0.0
  %599 = vmatprep.subr.mxu0 0.0
  %600 = vmatpush2.msra.mxu0 0.0
  %601 = vmatprep.mubr.f32.mxu0 0.0
  %602 = vmatmul.mubr.f32.gmra.mxu0 %v532
  %v603 = vpop.f32.mrf.mxu0
  %v604 = vadd.f32 0.0, %v603
  %v605 = vpop.f32.mrf.mxu0
  %606 = vmatprep.mubr.f32.mxu0 0.0
  %607 = vmatmul.mubr.f32.gmra.mxu0 %v535
  %v608 = vpop.f32.mrf.mxu0
  %v609 = vadd.f32 0.0, %v608
  %v610 = vpop.f32.mrf.mxu0
  %611 = vdwg.mxu0
  %v612 = vand.u32 %v83, 7
  %v613 = vand.u32 %v84, 7
  %vm614 = vcmp.eq.s32.totalorder %v612, 0
  %vm615 = vcmp.eq.s32.totalorder %v613, 0
  %v616 = vrot.slane %v604, 7
  %v617 = vrot.slane %v609, 7
  %v618 = vsel %vm99, %v616, %v617
  %v619 = vsel %vm99, %v617, %v616
  %v620 = vsel %vm614, 0.0, %v619
  %v621 = vsel %vm615, 0.0, %v618
  %vm622 = vcmp.eq.s32.totalorder %v612, 7
  %vm623 = vcmp.eq.s32.totalorder %v613, 7
  %v624 = vrot.slane %v604, 1
  %v625 = vrot.slane %v609, 1
  %v626 = vsel %vm116, %v624, %v625
  %v627 = vsel %vm116, %v625, %v624
  %v628 = vsel %vm622, 0.0, %v626
  %v629 = vsel %vm623, 0.0, %v627
  %632 = vrot.lane.b32.xlu0 %v604, 8
  %v633 = vpop.permute.xlu0 %632
  %634 = vrot.lane.b32.xlu0 %v609, 8
  %v635 = vpop.permute.xlu0 %634
  %640 = vrot.lane.b32.xlu0 %v628, 16
  %v641 = vpop.permute.xlu0 %640
  %642 = vrot.lane.b32.xlu0 %v629, 16
  %v643 = vpop.permute.xlu0 %642
  %v646 = vsel %vm157, %v620, %v633
  %v647 = vsel %vm157, %v621, %v635
  %v648 = vsel %vm162, %v646, %v641
  %v649 = vsel %vm162, %v647, %v643
  %v650 = vlaneseq
  %v651 = vshrl.u32 %v650, 7
  %v652 = vsub.s32 0, %v651
  %v653 = vrot.slane %v34, %v652
  %v655 = vsel %vm171, %v648, 0
  %v658 = vsel %vm171, %v649, 0
  %660 = vmatprep.subr.mxu0 0.0
  %661 = vmatpush1.msra.mxu0 0.0
  %662 = vmatprep.subr.mxu0 0.0
  %663 = vmatpush1.msra.mxu0 0.0
  %664 = vmatprep.subr.mxu0 0.0
  %665 = vmatpush1.msra.mxu0 0.0
  %666 = vmatprep.subr.mxu0 0.0
  %667 = vmatpush1.msra.mxu0 0.0
  %668 = vmatprep.subr.mxu0 0.0
  %669 = vmatpush1.msra.mxu0 0.0
  %670 = vmatprep.subr.mxu0 0.0
  %671 = vmatpush1.msra.mxu0 0.0
  %672 = vmatprep.subr.mxu0 0.0
  %673 = vmatpush1.msra.mxu0 0.0
  %674 = vmatprep.subr.mxu0 0.0
  %675 = vmatpush1.msra.mxu0 0.0
  %676 = vmatprep.subr.mxu0 0.0
  %677 = vmatpush1.msra.mxu0 0.0
  %678 = vmatprep.subr.mxu0 0.0
  %679 = vmatpush1.msra.mxu0 0.0
  %680 = vmatprep.subr.mxu0 0.0
  %681 = vmatpush1.msra.mxu0 0.0
  %682 = vmatprep.subr.mxu0 0.0
  %683 = vmatpush1.msra.mxu0 0.0
  %684 = vmatprep.subr.mxu0 0.0
  %685 = vmatpush1.msra.mxu0 0.0
  %686 = vmatprep.subr.mxu0 0.0
  %687 = vmatpush1.msra.mxu0 %v33
  %688 = vmatprep.subr.mxu0 0.0
  %689 = vmatpush1.msra.mxu0 %v32
  %690 = vmatprep.subr.mxu0 0.0
  %691 = vmatpush1.msra.mxu0 %v31
  %692 = vmatprep.subr.mxu0 0.0
  %693 = vmatpush2.msra.mxu0 0.0
  %694 = vmatprep.subr.mxu0 0.0
  %695 = vmatpush2.msra.mxu0 0.0
  %696 = vmatprep.subr.mxu0 0.0
  %697 = vmatpush2.msra.mxu0 0.0
  %698 = vmatprep.subr.mxu0 0.0
  %699 = vmatpush2.msra.mxu0 0.0
  %700 = vmatprep.subr.mxu0 0.0
  %701 = vmatpush2.msra.mxu0 0.0
  %702 = vmatprep.subr.mxu0 0.0
  %703 = vmatpush2.msra.mxu0 0.0
  %704 = vmatprep.subr.mxu0 0.0
  %705 = vmatpush2.msra.mxu0 0.0
  %706 = vmatprep.subr.mxu0 0.0
  %707 = vmatpush2.msra.mxu0 0.0
  %708 = vmatprep.subr.mxu0 0.0
  %709 = vmatpush2.msra.mxu0 0.0
  %710 = vmatprep.subr.mxu0 0.0
  %711 = vmatpush2.msra.mxu0 0.0
  %712 = vmatprep.subr.mxu0 0.0
  %713 = vmatpush2.msra.mxu0 0.0
  %714 = vmatprep.subr.mxu0 0.0
  %715 = vmatpush2.msra.mxu0 0.0
  %716 = vmatprep.subr.mxu0 0.0
  %717 = vmatpush2.msra.mxu0 0.0
  %718 = vmatprep.subr.mxu0 0.0
  %719 = vmatpush2.msra.mxu0 0.0
  %720 = vmatprep.subr.mxu0 0.0
  %721 = vmatpush2.msra.mxu0 0.0
  %722 = vmatprep.subr.mxu0 0.0
  %723 = vmatpush2.msra.mxu0 0.0
  %724 = vmatprep.mubr.f32.mxu0 0.0
  %725 = vmatmul.mubr.f32.gmra.mxu0 %v655
  %v726 = vpop.f32.mrf.mxu0
  %v727 = vadd.f32 %v653, %v726
  %v728 = vpop.f32.mrf.mxu0
  %729 = vmatprep.mubr.f32.mxu0 0.0
  %730 = vmatmul.mubr.f32.gmra.mxu0 %v658
  %v731 = vpop.f32.mrf.mxu0
  %v732 = vadd.f32 %v653, %v731
  %v733 = vpop.f32.mrf.mxu0
  %734 = vdwg.mxu0
  %v735 = vsel %vm157, %v727, 0.0
  %736 = vadd.xlane.f32.xlu0 %v735
  %v737 = vpop.xlane.xlu0 %736
  %v738 = vsel %vm157, %v732, 0.0
  %739 = vadd.xlane.f32.xlu0 %v738
  %v740 = vpop.xlane.xlu0 %739
  %v741 = vmul.f32 %v727, %v727
  %v742 = vmul.f32 %v732, %v732
  %v743 = vsel %vm157, %v741, 0.0
  %744 = vadd.xlane.f32.xlu0 %v743
  %v745 = vpop.xlane.xlu0 %744
  %v746 = vsel %vm157, %v742, 0.0
  %747 = vadd.xlane.f32.xlu0 %v746
  %v748 = vpop.xlane.xlu0 %747
  %v749 = vshra.s32 %v83, 3
  %v750 = vshra.s32 %v84, 3
  %v751 = vshra.s32 %v302, 3
  %vm752 = vcmp.eq.s32.totalorder %v749, %v751
  %vm753 = vcmp.eq.s32.totalorder %v750, %v751
  %v754 = vsel %vm752, 1, 0
  %v755 = vsel %vm753, 1, 0
  %v756 = vcvt.s32.f32 %v754
  %v757 = vcvt.s32.f32 %v755
  %v758 = vsel %vm316, %v737, %v745
  %v759 = vsel %vm316, %v740, %v748
  %v761 = vsel %vm162, %v756, 0
  %v764 = vsel %vm162, %v757, 0
  %766 = vmatprep.subr.mxu0 0.0
  %767 = vmatpush1.msra.mxu0 0.0
  %768 = vmatprep.subr.mxu0 0.0
  %769 = vmatpush1.msra.mxu0 0.0
  %770 = vmatprep.subr.mxu0 0.0
  %771 = vmatpush1.msra.mxu0 0.0
  %772 = vmatprep.subr.mxu0 0.0
  %773 = vmatpush1.msra.mxu0 0.0
  %774 = vmatprep.subr.mxu0 0.0
  %775 = vmatpush1.msra.mxu0 0.0
  %776 = vmatprep.subr.mxu0 0.0
  %777 = vmatpush1.msra.mxu0 0.0
  %778 = vmatprep.subr.mxu0 0.0
  %779 = vmatpush1.msra.mxu0 0.0
  %780 = vmatprep.subr.mxu0 0.0
  %781 = vmatpush1.msra.mxu0 0.0
  %782 = vmatprep.subr.mxu0 0.0
  %783 = vmatpush1.msra.mxu0 0.0
  %784 = vmatprep.subr.mxu0 0.0
  %785 = vmatpush1.msra.mxu0 0.0
  %786 = vmatprep.subr.mxu0 0.0
  %787 = vmatpush1.msra.mxu0 0.0
  %788 = vmatprep.subr.mxu0 0.0
  %789 = vmatpush1.msra.mxu0 0.0
  %790 = vmatprep.subr.mxu0 0.0
  %791 = vmatpush1.msra.mxu0 0.0
  %792 = vmatprep.subr.mxu0 0.0
  %793 = vmatpush1.msra.mxu0 0.0
  %794 = vmatprep.subr.mxu0 0.0
  %795 = vmatpush1.msra.mxu0 %v759
  %796 = vmatprep.subr.mxu0 0.0
  %797 = vmatpush1.msra.mxu0 %v758
  %798 = vmatprep.subr.mxu0 0.0
  %799 = vmatpush2.msra.mxu0 0.0
  %800 = vmatprep.subr.mxu0 0.0
  %801 = vmatpush2.msra.mxu0 0.0
  %802 = vmatprep.subr.mxu0 0.0
  %803 = vmatpush2.msra.mxu0 0.0
  %804 = vmatprep.subr.mxu0 0.0
  %805 = vmatpush2.msra.mxu0 0.0
  %806 = vmatprep.subr.mxu0 0.0
  %807 = vmatpush2.msra.mxu0 0.0
  %808 = vmatprep.subr.mxu0 0.0
  %809 = vmatpush2.msra.mxu0 0.0
  %810 = vmatprep.subr.mxu0 0.0
  %811 = vmatpush2.msra.mxu0 0.0
  %812 = vmatprep.subr.mxu0 0.0
  %813 = vmatpush2.msra.mxu0 0.0
  %814 = vmatprep.subr.mxu0 0.0
  %815 = vmatpush2.msra.mxu0 0.0
  %816 = vmatprep.subr.mxu0 0.0
  %817 = vmatpush2.msra.mxu0 0.0
  %818 = vmatprep.subr.mxu0 0.0
  %819 = vmatpush2.msra.mxu0 0.0
  %820 = vmatprep.subr.mxu0 0.0
  %821 = vmatpush2.msra.mxu0 0.0
  %822 = vmatprep.subr.mxu0 0.0
  %823 = vmatpush2.msra.mxu0 0.0
  %824 = vmatprep.subr.mxu0 0.0
  %825 = vmatpush2.msra.mxu0 0.0
  %826 = vmatprep.subr.mxu0 0.0
  %827 = vmatpush2.msra.mxu0 0.0
  %828 = vmatprep.subr.mxu0 0.0
  %829 = vmatpush2.msra.mxu0 0.0
  %830 = vmatprep.mubr.f32.mxu0 0.0
  %831 = vmatmul.mubr.f32.gmra.mxu0 %v761
  %v832 = vpop.f32.mrf.mxu0
  %v833 = vadd.f32 0.0, %v832
  %v834 = vpop.f32.mrf.mxu0
  %835 = vmatprep.mubr.f32.mxu0 0.0
  %836 = vmatmul.mubr.f32.gmra.mxu0 %v764
  %v837 = vpop.f32.mrf.mxu0
  %v838 = vadd.f32 0.0, %v837
  %v839 = vpop.f32.mrf.mxu0
  %840 = vdwg.mxu0
  %v841 = vmul.f32 %v833, 0.015625
  %v842 = vmul.f32 %v838, 0.015625
  %v843 = vmul.f32 %v841, %v841
  %v844 = vmul.f32 %v842, %v842
  %847 = vrot.lane.b32.xlu0 %v843, 1
  %v848 = vpop.permute.xlu0 %847
  %849 = vrot.lane.b32.xlu0 %v844, 1
  %v850 = vpop.permute.xlu0 %849
  %v853 = vsub.f32 %v841, %v848
  %v854 = vsub.f32 %v842, %v850
  %856 = vset.pattern.permute.xlu0 0
  %857 = vperm.xlu0 %856, %v841
  %v858 = vpop.permute.xlu0 %857
  %861 = vset.pattern.permute.xlu0 0
  %862 = vperm.xlu0 %861, %v842
  %v863 = vpop.permute.xlu0 %862
  %v865 = vsub.f32 %v727, %v858
  %v866 = vsub.f32 %v732, %v863
  %v867 = vadd.f32 %v853, 1e-05
  %v868 = vadd.f32 %v854, 1e-05
  %v869 = vrsqrt.pop %v867
  %v870 = vrsqrt.pop %v868
  %872 = vset.pattern.permute.xlu0 1
  %873 = vperm.xlu0 %872, %v869
  %v874 = vpop.permute.xlu0 %873
  %877 = vset.pattern.permute.xlu0 1
  %878 = vperm.xlu0 %877, %v870
  %v879 = vpop.permute.xlu0 %878
  %v881 = vmul.f32 %v865, %v874
  %v882 = vmul.f32 %v866, %v879
  %v883 = vmul.f32 %v881, %v35
  %v884 = vmul.f32 %v882, %v36
  %v885 = vadd.f32 %v883, %v37
  %v886 = vadd.f32 %v884, %v38
  %v887 = vrot.slane %v885, 1
  %v888 = vrot.slane %v886, 1
  %v889 = vsel %vm116, %v887, %v888
  %v890 = vsel %vm116, %v888, %v887
  %v891 = vmax.f32 %v885, %v889
  %v892 = vmax.f32 %v886, %v890
  %v893 = vsel %vm162, %v529, 0
  %895 = vmatprep.subr.mxu0 0.0
  %896 = vmatpush1.msra.mxu0 0.0
  %897 = vmatprep.subr.mxu0 0.0
  %898 = vmatpush1.msra.mxu0 0.0
  %899 = vmatprep.subr.mxu0 0.0
  %900 = vmatpush1.msra.mxu0 0.0
  %901 = vmatprep.subr.mxu0 0.0
  %902 = vmatpush1.msra.mxu0 0.0
  %903 = vmatprep.subr.mxu0 0.0
  %904 = vmatpush1.msra.mxu0 0.0
  %905 = vmatprep.subr.mxu0 0.0
  %906 = vmatpush1.msra.mxu0 0.0
  %907 = vmatprep.subr.mxu0 0.0
  %908 = vmatpush1.msra.mxu0 0.0
  %909 = vmatprep.subr.mxu0 0.0
  %910 = vmatpush1.msra.mxu0 0.0
  %911 = vmatprep.subr.mxu0 0.0
  %912 = vmatpush1.msra.mxu0 0.0
  %913 = vmatprep.subr.mxu0 0.0
  %914 = vmatpush1.msra.mxu0 0.0
  %915 = vmatprep.subr.mxu0 0.0
  %916 = vmatpush1.msra.mxu0 0.0
  %917 = vmatprep.subr.mxu0 0.0
  %918 = vmatpush1.msra.mxu0 0.0
  %919 = vmatprep.subr.mxu0 0.0
  %920 = vmatpush1.msra.mxu0 0.0
  %921 = vmatprep.subr.mxu0 0.0
  %922 = vmatpush1.msra.mxu0 0.0
  %923 = vmatprep.subr.mxu0 0.0
  %924 = vmatpush1.msra.mxu0 %v892
  %925 = vmatprep.subr.mxu0 0.0
  %926 = vmatpush1.msra.mxu0 %v891
  %927 = vmatprep.subr.mxu0 0.0
  %928 = vmatpush2.msra.mxu0 0.0
  %929 = vmatprep.subr.mxu0 0.0
  %930 = vmatpush2.msra.mxu0 0.0
  %931 = vmatprep.subr.mxu0 0.0
  %932 = vmatpush2.msra.mxu0 0.0
  %933 = vmatprep.subr.mxu0 0.0
  %934 = vmatpush2.msra.mxu0 0.0
  %935 = vmatprep.subr.mxu0 0.0
  %936 = vmatpush2.msra.mxu0 0.0
  %937 = vmatprep.subr.mxu0 0.0
  %938 = vmatpush2.msra.mxu0 0.0
  %939 = vmatprep.subr.mxu0 0.0
  %940 = vmatpush2.msra.mxu0 0.0
  %941 = vmatprep.subr.mxu0 0.0
  %942 = vmatpush2.msra.mxu0 0.0
  %943 = vmatprep.subr.mxu0 0.0
  %944 = vmatpush2.msra.mxu0 0.0
  %945 = vmatprep.subr.mxu0 0.0
  %946 = vmatpush2.msra.mxu0 0.0
  %947 = vmatprep.subr.mxu0 0.0
  %948 = vmatpush2.msra.mxu0 0.0
  %949 = vmatprep.subr.mxu0 0.0
  %950 = vmatpush2.msra.mxu0 0.0
  %951 = vmatprep.subr.mxu0 0.0
  %952 = vmatpush2.msra.mxu0 0.0
  %953 = vmatprep.subr.mxu0 0.0
  %954 = vmatpush2.msra.mxu0 0.0
  %955 = vmatprep.subr.mxu0 0.0
  %956 = vmatpush2.msra.mxu0 0.0
  %957 = vmatprep.subr.mxu0 0.0
  %958 = vmatpush2.msra.mxu0 0.0
  %959 = vmatprep.mubr.f32.mxu0 0.0
  %960 = vmatmul.mubr.f32.gmra.mxu0 %v893
  %v961 = vpop.f32.mrf.mxu0
  %v962 = vadd.f32 0.0, %v961
  %v963 = vpop.f32.mrf.mxu0
  %964 = vdwg.mxu0
  %v965 = vand.u32 %v83, 3
  %vm966 = vcmp.eq.s32.totalorder %v965, 0
  %v967 = vrot.slane %v962, 7
  %v968 = vsel %vm966, 0.0, %v967
  %vm969 = vcmp.eq.s32.totalorder %v965, 3
  %v970 = vrot.slane %v962, 1
  %v971 = vsel %vm969, 0.0, %v970
  %973 = vrot.lane.b32.xlu0 %v962, 8
  %v974 = vpop.permute.xlu0 %973
  %977 = vrot.lane.b32.xlu0 %v971, 16
  %v978 = vpop.permute.xlu0 %977
  %v980 = vsel %vm157, %v968, %v974
  %v981 = vsel %vm162, %v980, %v978
  %v982 = vlaneseq
  %v983 = vshrl.u32 %v982, 7
  %v984 = vsub.s32 0, %v983
  %v985 = vrot.slane %v42, %v984
  %v987 = vsel %vm171, %v981, 0
  %989 = vmatprep.subr.mxu0 0.0
  %990 = vmatpush1.msra.mxu0 0.0
  %991 = vmatprep.subr.mxu0 0.0
  %992 = vmatpush1.msra.mxu0 0.0
  %993 = vmatprep.subr.mxu0 0.0
  %994 = vmatpush1.msra.mxu0 0.0
  %995 = vmatprep.subr.mxu0 0.0
  %996 = vmatpush1.msra.mxu0 0.0
  %997 = vmatprep.subr.mxu0 0.0
  %998 = vmatpush1.msra.mxu0 0.0
  %999 = vmatprep.subr.mxu0 0.0
  %1000 = vmatpush1.msra.mxu0 0.0
  %1001 = vmatprep.subr.mxu0 0.0
  %1002 = vmatpush1.msra.mxu0 0.0
  %1003 = vmatprep.subr.mxu0 0.0
  %1004 = vmatpush1.msra.mxu0 0.0
  %1005 = vmatprep.subr.mxu0 0.0
  %1006 = vmatpush1.msra.mxu0 0.0
  %1007 = vmatprep.subr.mxu0 0.0
  %1008 = vmatpush1.msra.mxu0 0.0
  %1009 = vmatprep.subr.mxu0 0.0
  %1010 = vmatpush1.msra.mxu0 0.0
  %1011 = vmatprep.subr.mxu0 0.0
  %1012 = vmatpush1.msra.mxu0 0.0
  %1013 = vmatprep.subr.mxu0 0.0
  %1014 = vmatpush1.msra.mxu0 0.0
  %1015 = vmatprep.subr.mxu0 0.0
  %1016 = vmatpush1.msra.mxu0 %v41
  %1017 = vmatprep.subr.mxu0 0.0
  %1018 = vmatpush1.msra.mxu0 %v40
  %1019 = vmatprep.subr.mxu0 0.0
  %1020 = vmatpush1.msra.mxu0 %v39
  %1021 = vmatprep.subr.mxu0 0.0
  %1022 = vmatpush2.msra.mxu0 0.0
  %1023 = vmatprep.subr.mxu0 0.0
  %1024 = vmatpush2.msra.mxu0 0.0
  %1025 = vmatprep.subr.mxu0 0.0
  %1026 = vmatpush2.msra.mxu0 0.0
  %1027 = vmatprep.subr.mxu0 0.0
  %1028 = vmatpush2.msra.mxu0 0.0
  %1029 = vmatprep.subr.mxu0 0.0
  %1030 = vmatpush2.msra.mxu0 0.0
  %1031 = vmatprep.subr.mxu0 0.0
  %1032 = vmatpush2.msra.mxu0 0.0
  %1033 = vmatprep.subr.mxu0 0.0
  %1034 = vmatpush2.msra.mxu0 0.0
  %1035 = vmatprep.subr.mxu0 0.0
  %1036 = vmatpush2.msra.mxu0 0.0
  %1037 = vmatprep.subr.mxu0 0.0
  %1038 = vmatpush2.msra.mxu0 0.0
  %1039 = vmatprep.subr.mxu0 0.0
  %1040 = vmatpush2.msra.mxu0 0.0
  %1041 = vmatprep.subr.mxu0 0.0
  %1042 = vmatpush2.msra.mxu0 0.0
  %1043 = vmatprep.subr.mxu0 0.0
  %1044 = vmatpush2.msra.mxu0 0.0
  %1045 = vmatprep.subr.mxu0 0.0
  %1046 = vmatpush2.msra.mxu0 0.0
  %1047 = vmatprep.subr.mxu0 0.0
  %1048 = vmatpush2.msra.mxu0 0.0
  %1049 = vmatprep.subr.mxu0 0.0
  %1050 = vmatpush2.msra.mxu0 0.0
  %1051 = vmatprep.subr.mxu0 0.0
  %1052 = vmatpush2.msra.mxu0 0.0
  %1053 = vmatprep.mubr.f32.mxu0 0.0
  %1054 = vmatmul.mubr.f32.gmra.mxu0 %v987
  %v1055 = vpop.f32.mrf.mxu0
  %v1056 = vadd.f32 %v985, %v1055
  %v1057 = vpop.f32.mrf.mxu0
  %1058 = vdwg.mxu0
  %v1059 = vrot.slane %v1056, 1
  %v1060 = vmax.f32 %v1056, %v1059
  %v1061 = vrot.slane %v1060, 2
  %v1062 = vmax.f32 %v1060, %v1061
  %v1063 = vshll.u32 %v83, 2
  %vm1064 = vcmp.eq.s32.totalorder %v302, %v1063
  %v1065 = vsel %vm1064, 1, 0
  %v1066 = vcvt.s32.f32 %v1065
  %v1068 = vsel %vm157, %v1066, 0
  %1070 = vmatprep.subr.mxu0 0.0
  %1071 = vmatpush1.msra.mxu0 0.0
  %1072 = vmatprep.subr.mxu0 0.0
  %1073 = vmatpush1.msra.mxu0 0.0
  %1074 = vmatprep.subr.mxu0 0.0
  %1075 = vmatpush1.msra.mxu0 0.0
  %1076 = vmatprep.subr.mxu0 0.0
  %1077 = vmatpush1.msra.mxu0 0.0
  %1078 = vmatprep.subr.mxu0 0.0
  %1079 = vmatpush1.msra.mxu0 0.0
  %1080 = vmatprep.subr.mxu0 0.0
  %1081 = vmatpush1.msra.mxu0 0.0
  %1082 = vmatprep.subr.mxu0 0.0
  %1083 = vmatpush1.msra.mxu0 0.0
  %1084 = vmatprep.subr.mxu0 0.0
  %1085 = vmatpush1.msra.mxu0 0.0
  %1086 = vmatprep.subr.mxu0 0.0
  %1087 = vmatpush1.msra.mxu0 0.0
  %1088 = vmatprep.subr.mxu0 0.0
  %1089 = vmatpush1.msra.mxu0 0.0
  %1090 = vmatprep.subr.mxu0 0.0
  %1091 = vmatpush1.msra.mxu0 0.0
  %1092 = vmatprep.subr.mxu0 0.0
  %1093 = vmatpush1.msra.mxu0 0.0
  %1094 = vmatprep.subr.mxu0 0.0
  %1095 = vmatpush1.msra.mxu0 0.0
  %1096 = vmatprep.subr.mxu0 0.0
  %1097 = vmatpush1.msra.mxu0 0.0
  %1098 = vmatprep.subr.mxu0 0.0
  %1099 = vmatpush1.msra.mxu0 0.0
  %1100 = vmatprep.subr.mxu0 0.0
  %1101 = vmatpush1.msra.mxu0 %v1062
  %1102 = vmatprep.subr.mxu0 0.0
  %1103 = vmatpush2.msra.mxu0 0.0
  %1104 = vmatprep.subr.mxu0 0.0
  %1105 = vmatpush2.msra.mxu0 0.0
  %1106 = vmatprep.subr.mxu0 0.0
  %1107 = vmatpush2.msra.mxu0 0.0
  %1108 = vmatprep.subr.mxu0 0.0
  %1109 = vmatpush2.msra.mxu0 0.0
  %1110 = vmatprep.subr.mxu0 0.0
  %1111 = vmatpush2.msra.mxu0 0.0
  %1112 = vmatprep.subr.mxu0 0.0
  %1113 = vmatpush2.msra.mxu0 0.0
  %1114 = vmatprep.subr.mxu0 0.0
  %1115 = vmatpush2.msra.mxu0 0.0
  %1116 = vmatprep.subr.mxu0 0.0
  %1117 = vmatpush2.msra.mxu0 0.0
  %1118 = vmatprep.subr.mxu0 0.0
  %1119 = vmatpush2.msra.mxu0 0.0
  %1120 = vmatprep.subr.mxu0 0.0
  %1121 = vmatpush2.msra.mxu0 0.0
  %1122 = vmatprep.subr.mxu0 0.0
  %1123 = vmatpush2.msra.mxu0 0.0
  %1124 = vmatprep.subr.mxu0 0.0
  %1125 = vmatpush2.msra.mxu0 0.0
  %1126 = vmatprep.subr.mxu0 0.0
  %1127 = vmatpush2.msra.mxu0 0.0
  %1128 = vmatprep.subr.mxu0 0.0
  %1129 = vmatpush2.msra.mxu0 0.0
  %1130 = vmatprep.subr.mxu0 0.0
  %1131 = vmatpush2.msra.mxu0 0.0
  %1132 = vmatprep.subr.mxu0 0.0
  %1133 = vmatpush2.msra.mxu0 0.0
  %1134 = vmatprep.mubr.f32.mxu0 0.0
  %1135 = vmatmul.mubr.f32.gmra.mxu0 %v1068
  %v1136 = vpop.f32.mrf.mxu0
  %v1137 = vadd.f32 0.0, %v1136
  %v1138 = vpop.f32.mrf.mxu0
  %1139 = vdwg.mxu0
  %v1140 = vlaneseq
  %v1141 = vshrl.u32 %v1140, 7
  %v1142 = vsub.s32 0, %v1141
  %v1143 = vrot.slane %v59, %v1142
  %1144 = vmatprep.subr.mxu0 0.0
  %1145 = vmatpush1.msra.mxu0 %v58
  %1146 = vmatprep.subr.mxu0 0.0
  %1147 = vmatpush1.msra.mxu0 %v57
  %1148 = vmatprep.subr.mxu0 0.0
  %1149 = vmatpush1.msra.mxu0 %v56
  %1150 = vmatprep.subr.mxu0 0.0
  %1151 = vmatpush1.msra.mxu0 %v55
  %1152 = vmatprep.subr.mxu0 0.0
  %1153 = vmatpush1.msra.mxu0 %v54
  %1154 = vmatprep.subr.mxu0 0.0
  %1155 = vmatpush1.msra.mxu0 %v53
  %1156 = vmatprep.subr.mxu0 0.0
  %1157 = vmatpush1.msra.mxu0 %v52
  %1158 = vmatprep.subr.mxu0 0.0
  %1159 = vmatpush1.msra.mxu0 %v51
  %1160 = vmatprep.subr.mxu0 0.0
  %1161 = vmatpush1.msra.mxu0 %v50
  %1162 = vmatprep.subr.mxu0 0.0
  %1163 = vmatpush1.msra.mxu0 %v49
  %1164 = vmatprep.subr.mxu0 0.0
  %1165 = vmatpush1.msra.mxu0 %v48
  %1166 = vmatprep.subr.mxu0 0.0
  %1167 = vmatpush1.msra.mxu0 %v47
  %1168 = vmatprep.subr.mxu0 0.0
  %1169 = vmatpush1.msra.mxu0 %v46
  %1170 = vmatprep.subr.mxu0 0.0
  %1171 = vmatpush1.msra.mxu0 %v45
  %1172 = vmatprep.subr.mxu0 0.0
  %1173 = vmatpush1.msra.mxu0 %v44
  %1174 = vmatprep.subr.mxu0 0.0
  %1175 = vmatpush1.msra.mxu0 %v43
  %1176 = vmatprep.subr.mxu0 0.0
  %1177 = vmatpush2.msra.mxu0 0.0
  %1178 = vmatprep.subr.mxu0 0.0
  %1179 = vmatpush2.msra.mxu0 0.0
  %1180 = vmatprep.subr.mxu0 0.0
  %1181 = vmatpush2.msra.mxu0 0.0
  %1182 = vmatprep.subr.mxu0 0.0
  %1183 = vmatpush2.msra.mxu0 0.0
  %1184 = vmatprep.subr.mxu0 0.0
  %1185 = vmatpush2.msra.mxu0 0.0
  %1186 = vmatprep.subr.mxu0 0.0
  %1187 = vmatpush2.msra.mxu0 0.0
  %1188 = vmatprep.subr.mxu0 0.0
  %1189 = vmatpush2.msra.mxu0 0.0
  %1190 = vmatprep.subr.mxu0 0.0
  %1191 = vmatpush2.msra.mxu0 0.0
  %1192 = vmatprep.subr.mxu0 0.0
  %1193 = vmatpush2.msra.mxu0 0.0
  %1194 = vmatprep.subr.mxu0 0.0
  %1195 = vmatpush2.msra.mxu0 0.0
  %1196 = vmatprep.subr.mxu0 0.0
  %1197 = vmatpush2.msra.mxu0 0.0
  %1198 = vmatprep.subr.mxu0 0.0
  %1199 = vmatpush2.msra.mxu0 0.0
  %1200 = vmatprep.subr.mxu0 0.0
  %1201 = vmatpush2.msra.mxu0 0.0
  %1202 = vmatprep.subr.mxu0 0.0
  %1203 = vmatpush2.msra.mxu0 0.0
  %1204 = vmatprep.subr.mxu0 0.0
  %1205 = vmatpush2.msra.mxu0 0.0
  %1206 = vmatprep.subr.mxu0 0.0
  %1207 = vmatpush2.msra.mxu0 0.0
  %1208 = vmatprep.mubr.f32.mxu0 0.0
  %1209 = vmatmul.mubr.f32.gmra.mxu0 %v1137
  %v1210 = vpop.f32.mrf.mxu0
  %v1211 = vadd.f32 %v1143, %v1210
  %v1212 = vpop.f32.mrf.mxu0
  %1213 = vdwg.mxu0
  %v1214 = vlaneseq
  %v1215 = vshrl.u32 %v1214, 7
  %v1216 = vsub.s32 0, %v1215
  %v1217 = vrot.slane %v68, %v1216
  %vm1218 = vcmask 523264
  %v1220 = vsel %vm1218, %v1211, 0
  %1222 = vmatprep.subr.mxu0 0.0
  %1223 = vmatpush1.msra.mxu0 0.0
  %1224 = vmatprep.subr.mxu0 0.0
  %1225 = vmatpush1.msra.mxu0 0.0
  %1226 = vmatprep.subr.mxu0 0.0
  %1227 = vmatpush1.msra.mxu0 0.0
  %1228 = vmatprep.subr.mxu0 0.0
  %1229 = vmatpush1.msra.mxu0 0.0
  %1230 = vmatprep.subr.mxu0 0.0
  %1231 = vmatpush1.msra.mxu0 0.0
  %1232 = vmatprep.subr.mxu0 0.0
  %1233 = vmatpush1.msra.mxu0 0.0
  %1234 = vmatprep.subr.mxu0 0.0
  %1235 = vmatpush1.msra.mxu0 0.0
  %1236 = vmatprep.subr.mxu0 0.0
  %1237 = vmatpush1.msra.mxu0 0.0
  %1238 = vmatprep.subr.mxu0 0.0
  %1239 = vmatpush1.msra.mxu0 %v67
  %1240 = vmatprep.subr.mxu0 0.0
  %1241 = vmatpush1.msra.mxu0 %v66
  %1242 = vmatprep.subr.mxu0 0.0
  %1243 = vmatpush1.msra.mxu0 %v65
  %1244 = vmatprep.subr.mxu0 0.0
  %1245 = vmatpush1.msra.mxu0 %v64
  %1246 = vmatprep.subr.mxu0 0.0
  %1247 = vmatpush1.msra.mxu0 %v63
  %1248 = vmatprep.subr.mxu0 0.0
  %1249 = vmatpush1.msra.mxu0 %v62
  %1250 = vmatprep.subr.mxu0 0.0
  %1251 = vmatpush1.msra.mxu0 %v61
  %1252 = vmatprep.subr.mxu0 0.0
  %1253 = vmatpush1.msra.mxu0 %v60
  %1254 = vmatprep.subr.mxu0 0.0
  %1255 = vmatpush2.msra.mxu0 0.0
  %1256 = vmatprep.subr.mxu0 0.0
  %1257 = vmatpush2.msra.mxu0 0.0
  %1258 = vmatprep.subr.mxu0 0.0
  %1259 = vmatpush2.msra.mxu0 0.0
  %1260 = vmatprep.subr.mxu0 0.0
  %1261 = vmatpush2.msra.mxu0 0.0
  %1262 = vmatprep.subr.mxu0 0.0
  %1263 = vmatpush2.msra.mxu0 0.0
  %1264 = vmatprep.subr.mxu0 0.0
  %1265 = vmatpush2.msra.mxu0 0.0
  %1266 = vmatprep.subr.mxu0 0.0
  %1267 = vmatpush2.msra.mxu0 0.0
  %1268 = vmatprep.subr.mxu0 0.0
  %1269 = vmatpush2.msra.mxu0 0.0
  %1270 = vmatprep.subr.mxu0 0.0
  %1271 = vmatpush2.msra.mxu0 0.0
  %1272 = vmatprep.subr.mxu0 0.0
  %1273 = vmatpush2.msra.mxu0 0.0
  %1274 = vmatprep.subr.mxu0 0.0
  %1275 = vmatpush2.msra.mxu0 0.0
  %1276 = vmatprep.subr.mxu0 0.0
  %1277 = vmatpush2.msra.mxu0 0.0
  %1278 = vmatprep.subr.mxu0 0.0
  %1279 = vmatpush2.msra.mxu0 0.0
  %1280 = vmatprep.subr.mxu0 0.0
  %1281 = vmatpush2.msra.mxu0 0.0
  %1282 = vmatprep.subr.mxu0 0.0
  %1283 = vmatpush2.msra.mxu0 0.0
  %1284 = vmatprep.subr.mxu0 0.0
  %1285 = vmatpush2.msra.mxu0 0.0
  %1286 = vmatprep.mubr.f32.mxu0 0.0
  %1287 = vmatmul.mubr.f32.gmra.mxu0 %v1220
  %v1288 = vpop.f32.mrf.mxu0
  %v1289 = vadd.f32 %v1217, %v1288
  %v1290 = vpop.f32.mrf.mxu0
  %1291 = vdwg.mxu0
  %v1292 = vlaneseq
  %v1293 = vshrl.u32 %v1292, 7
  %v1294 = vsub.s32 0, %v1293
  %v1295 = vrot.slane %v77, %v1294
  %v1297 = vsel %vm1218, %v1289, 0
  %1299 = vmatprep.subr.mxu0 0.0
  %1300 = vmatpush1.msra.mxu0 0.0
  %1301 = vmatprep.subr.mxu0 0.0
  %1302 = vmatpush1.msra.mxu0 0.0
  %1303 = vmatprep.subr.mxu0 0.0
  %1304 = vmatpush1.msra.mxu0 0.0
  %1305 = vmatprep.subr.mxu0 0.0
  %1306 = vmatpush1.msra.mxu0 0.0
  %1307 = vmatprep.subr.mxu0 0.0
  %1308 = vmatpush1.msra.mxu0 0.0
  %1309 = vmatprep.subr.mxu0 0.0
  %1310 = vmatpush1.msra.mxu0 0.0
  %1311 = vmatprep.subr.mxu0 0.0
  %1312 = vmatpush1.msra.mxu0 0.0
  %1313 = vmatprep.subr.mxu0 0.0
  %1314 = vmatpush1.msra.mxu0 0.0
  %1315 = vmatprep.subr.mxu0 0.0
  %1316 = vmatpush1.msra.mxu0 %v76
  %1317 = vmatprep.subr.mxu0 0.0
  %1318 = vmatpush1.msra.mxu0 %v75
  %1319 = vmatprep.subr.mxu0 0.0
  %1320 = vmatpush1.msra.mxu0 %v74
  %1321 = vmatprep.subr.mxu0 0.0
  %1322 = vmatpush1.msra.mxu0 %v73
  %1323 = vmatprep.subr.mxu0 0.0
  %1324 = vmatpush1.msra.mxu0 %v72
  %1325 = vmatprep.subr.mxu0 0.0
  %1326 = vmatpush1.msra.mxu0 %v71
  %1327 = vmatprep.subr.mxu0 0.0
  %1328 = vmatpush1.msra.mxu0 %v70
  %1329 = vmatprep.subr.mxu0 0.0
  %1330 = vmatpush1.msra.mxu0 %v69
  %1331 = vmatprep.subr.mxu0 0.0
  %1332 = vmatpush2.msra.mxu0 0.0
  %1333 = vmatprep.subr.mxu0 0.0
  %1334 = vmatpush2.msra.mxu0 0.0
  %1335 = vmatprep.subr.mxu0 0.0
  %1336 = vmatpush2.msra.mxu0 0.0
  %1337 = vmatprep.subr.mxu0 0.0
  %1338 = vmatpush2.msra.mxu0 0.0
  %1339 = vmatprep.subr.mxu0 0.0
  %1340 = vmatpush2.msra.mxu0 0.0
  %1341 = vmatprep.subr.mxu0 0.0
  %1342 = vmatpush2.msra.mxu0 0.0
  %1343 = vmatprep.subr.mxu0 0.0
  %1344 = vmatpush2.msra.mxu0 0.0
  %1345 = vmatprep.subr.mxu0 0.0
  %1346 = vmatpush2.msra.mxu0 0.0
  %1347 = vmatprep.subr.mxu0 0.0
  %1348 = vmatpush2.msra.mxu0 0.0
  %1349 = vmatprep.subr.mxu0 0.0
  %1350 = vmatpush2.msra.mxu0 0.0
  %1351 = vmatprep.subr.mxu0 0.0
  %1352 = vmatpush2.msra.mxu0 0.0
  %1353 = vmatprep.subr.mxu0 0.0
  %1354 = vmatpush2.msra.mxu0 0.0
  %1355 = vmatprep.subr.mxu0 0.0
  %1356 = vmatpush2.msra.mxu0 0.0
  %1357 = vmatprep.subr.mxu0 0.0
  %1358 = vmatpush2.msra.mxu0 0.0
  %1359 = vmatprep.subr.mxu0 0.0
  %1360 = vmatpush2.msra.mxu0 0.0
  %1361 = vmatprep.subr.mxu0 0.0
  %1362 = vmatpush2.msra.mxu0 0.0
  %1363 = vmatprep.mubr.f32.mxu0 0.0
  %1364 = vmatmul.mubr.f32.gmra.mxu0 %v1297
  %v1365 = vpop.f32.mrf.mxu0
  %v1366 = vadd.f32 %v1295, %v1365
  %v1367 = vpop.f32.mrf.mxu0
  %1368 = vdwg.mxu0
  %v1369 = vsub.f32 0.0, %v1366
  %v1370 = vmul.f32 %v1369, 1.442695
  %v1371 = vpow.pop %v1370
  %v1372 = vadd.f32 %v1371, 1.0
  %v1373 = vrcp.pop %v1372
  %vm1374 = vcmask 1024
  %1375 = vst.msk [vmem:[%s4] sm:$0x3] %vm1374, %v1373
  %1377 = vrot.lane.b32.xlu0 %v1366, 127
  %v1378 = vpop.permute.xlu0 %1377
  %1380 = vst.msk [vmem:[%s5] sm:$0x3] %vm1374, %v1378
  // Predicated region
  $region18: #{forward.1} parent=0 // pred_check
    _
  $region19: #{forward.1} parent=0 // pred_check_branch
    %1382 = sbr.rel (0) target = $region21
  $region20: #{forward.1} parent=0 // pred_region
    _
  $region21: #{forward.1} parent=0 // pred_fallthru
    _
  // Predicated region
  $region22: #{forward.1} parent=0 // pred_check
    _
  $region23: #{forward.1} parent=0 // pred_check_branch
    %1384 = sbr.rel (0) target = $region25
  $region24: #{forward.1} parent=0 // pred_region
    _
  $region25: #{forward.1} parent=0 // pred_fallthru
    _
  // Predicated region
  $region26: #{forward.1} parent=0 // pred_check
    _
  $region27: #{forward.1} parent=0 // pred_check_branch
    %1386 = sbr.rel (0) target = $region29
  $region28: #{forward.1} parent=0 // pred_region
    _
  $region29: #{forward.1} parent=0 // pred_fallthru
    _
  // Predicated region
  $region30: #{forward.1} parent=0 // pred_check
    _
  $region31: #{forward.1} parent=0 // pred_check_branch
    %1388 = sbr.rel (0) target = $region33
  $region32: #{forward.1} parent=0 // pred_region
    _
  $region33: #{forward.1} parent=0 // pred_fallthru
    _

</llo_original>
